<compile_context>
chip_gen: v6e
topology: v6e:2x2x1
jax: 0.10.0
libtpu: 0.0.40
codegen_flags: <defaults>
</compile_context>

<pallas_src>
import functools

import jax
import jax.numpy as jnp
from jax.experimental import pallas as pl
from jax.experimental.pallas import tpu as pltpu

EPS = 1e-5


def _round_up(x, m):
    return (x + m - 1) // m * m


# ----------------------------- Pallas kernel --------------------------------
def _fused_resblock_kernel(colid_ref, xp_ref, w1_ref, w2_ref, xres_ref, o_ref,
                           h1pad_ref, slab_ref, *, C, H, W, HWp_pad, Wslab,
                           P_in):
    # colid_ref : (1, HWp_pad) int32  column index (flat % Wp; ==Wp on tail lanes)
    # xp_ref    : (C, P_in)           reflect-padded input, flat, zero tail
    # w1_ref    : (3, C, 3C)          stage-1 weights, [dy][o, dx*C + i]
    # w2_ref    : (3, C, 3C)          stage-2 weights
    # xres_ref  : (C, HWp_pad) f32    residual (x) in the stride-Wp flat layout
    # o_ref     : (C, HWp_pad) f32    output in the stride-Wp flat layout
    # h1pad_ref : (C, P_in)           scratch: reflect-padded stage-1 output
    # slab_ref  : (3C, Wslab)         scratch: dx-stacked conv operand
    Wp = W + 2
    inv_count = 1.0 / float(H * W)

    col = colid_ref[...]                       # (1, HWp_pad)
    valid = col < W                            # real output columns
    is_left = col == 0                         # padded column 0
    is_right = col == (Wp - 1)                 # padded column W+1

    def conv3x3(src_ref, w_ref):
        # Stack the 3 dx taps along the contraction dim once:
        #   slab[dx*C + i, l] = src[i, dx + l]
        # then 3 MXU matmuls with K=3C (one per dy, lane offset dy*Wp),
        # accumulator seeded by the first dot (no zero-fill pass).
        for dx in range(3):
            slab_ref[dx * C:(dx + 1) * C, :] = src_ref[:, dx:dx + Wslab]
        acc = None
        for dy in range(3):
            taps = slab_ref[:, dy * Wp:dy * Wp + HWp_pad]        # (3C, HWp_pad)
            part = jnp.dot(w_ref[dy], taps,
                           preferred_element_type=jnp.float32)
            acc = part if acc is None else acc + part
        return acc                                               # (C, HWp_pad) f32

    def inorm(y):
        # InstanceNorm2d(affine=False): single-pass masked mean / E[y^2].
        yv = jnp.where(valid, y, 0.0)
        s1 = jnp.sum(yv, axis=1, keepdims=True)
        s2 = jnp.sum(yv * yv, axis=1, keepdims=True)
        mean = s1 * inv_count
        var = s2 * inv_count - mean * mean
        return (y - mean) * jax.lax.rsqrt(var + EPS)

    # ---- stage 1: conv -> instance-norm -> ReLU (stays in VMEM/vregs) ------
    h1 = jnp.maximum(inorm(conv3x3(xp_ref, w1_ref)), 0.0)       # (C, HWp_pad) f32

    # ---- rebuild ReflectionPad2d(1)(h1): rolls + select + ONE store --------
    # View S = h1pad[Wp : Wp+HWp] covers padded rows 1..H:
    #   interior (col 1..W) : S[i] = h1[i-1]  -> roll(+1)
    #   left pad (col 0)    : S[i] = h1[i+1]  -> roll(-1)
    #   right pad(col Wp-1) : S[i] = h1[i-3]  -> roll(+3)
    # (roll wrap lanes only land on positions overwritten by the other branch
    #  or on dead lanes.)
    base = pltpu.roll(h1, shift=1, axis=1)
    lft = pltpu.roll(h1, shift=HWp_pad - 1, axis=1)              # == roll(-1)
    rgt = pltpu.roll(h1, shift=3, axis=1)
    s = jnp.where(is_left, lft, jnp.where(is_right, rgt, base))
    h1pad_ref[:, Wp:Wp + HWp_pad] = s.astype(h1pad_ref.dtype)
    # zero only the tail past padded row H+1 (everything else is overwritten)
    h1pad_ref[:, (H + 2) * Wp:P_in] = jnp.zeros(
        (C, P_in - (H + 2) * Wp), h1pad_ref.dtype)
    # row reflection: padded row 0 = padded row 2, padded row H+1 = padded row H-1
    h1pad_ref[:, 0:Wp] = h1pad_ref[:, 2 * Wp:3 * Wp]
    h1pad_ref[:, (H + 1) * Wp:(H + 2) * Wp] = h1pad_ref[:, (H - 1) * Wp:H * Wp]

    # ---- stage 2: conv -> instance-norm -> + residual -----------------------
    y2 = inorm(conv3x3(h1pad_ref, w2_ref))
    o_ref[...] = (y2 + xres_ref[...]).astype(o_ref.dtype)


# ------------------------------ JAX wrapper -----------------------------------
def residual_block(x, w1, b1, w2, b2, *, compute_dtype=jnp.bfloat16):
    """Pallas implementation of ResidualBlock.forward, x: (N, C, H, W) float32.

    b1/b2 are accepted for API parity with nn.Conv2d(bias=True) but are unused:
    a per-channel bias added immediately before InstanceNorm2d(affine=False) is
    removed exactly by the mean subtraction (variance unchanged).
    """
    del b1, b2
    N, C, H, W = x.shape
    Wp, Hp = W + 2, H + 2
    HWp = H * Wp
    Cp = _round_up(C, 8)                        # sublane-aligned channel count
    HWp_pad = _round_up(HWp, 128)               # lane-dense flat spatial length
    Wslab = _round_up(HWp_pad + 2 * Wp, 128)    # stacked-tap slab lane width
    P_in = _round_up(Wslab + 2, 128)            # flat padded-image length (+ tail)

    # Zero-pad channels to a sublane multiple: padded channels stay exactly 0
    # through conv / instance-norm / relu and are sliced off at the end.
    if Cp != C:
        x_c = jnp.pad(x, ((0, 0), (0, Cp - C), (0, 0), (0, 0)))
        w1c = jnp.pad(w1, ((0, Cp - C), (0, Cp - C), (0, 0), (0, 0)))
        w2c = jnp.pad(w2, ((0, Cp - C), (0, Cp - C), (0, 0), (0, 0)))
    else:
        x_c, w1c, w2c = x, w1, w2

    # Reflection-pad once in JAX (layout glue), flatten with row stride Wp,
    # zero tail so every shifted tap view stays in bounds.
    xp = jnp.pad(x_c, ((0, 0), (0, 0), (1, 1), (1, 1)), mode="reflect")
    xp_flat = jnp.pad(xp.reshape(N, Cp, Hp * Wp),
                      ((0, 0), (0, 0), (0, P_in - Hp * Wp))).astype(compute_dtype)

    # Residual in the same stride-Wp flat, lane-padded layout (kept in f32).
    xres = jnp.pad(x_c, ((0, 0), (0, 0), (0, 0), (0, 2))).reshape(N, Cp, HWp)
    xres = jnp.pad(xres, ((0, 0), (0, 0), (0, HWp_pad - HWp)))

    # (C_out, C_in, 3, 3) -> (3, C_out, 3*C_in): per-dy weights with dx folded
    # into the contraction dim (weight column dx*Cp + i  <->  slab row dx*Cp + i).
    def fold(w):
        wt = jnp.transpose(w, (2, 0, 3, 1))            # (dy, o, dx, i)
        return wt.reshape(3, Cp, 3 * Cp).astype(compute_dtype)

    w1_t, w2_t = fold(w1c), fold(w2c)

    # Per-lane column id of the flat layout (Wp sentinel on the padded tail so
    # tail lanes are excluded from the norm mask); (1, HWp_pad) only - never
    # broadcast to (C, HWp_pad) in the kernel.
    col = jnp.arange(HWp, dtype=jnp.int32) % Wp
    colid = jnp.concatenate(
        [col, jnp.full((HWp_pad - HWp,), Wp, dtype=jnp.int32)]).reshape(1, HWp_pad)

    kernel = functools.partial(_fused_resblock_kernel, C=Cp, H=H, W=W,
                               HWp_pad=HWp_pad, Wslab=Wslab, P_in=P_in)

    itemsize = jnp.dtype(compute_dtype).itemsize
    flops = 2 * 2 * 9 * Cp * Cp * HWp_pad * N
    bytes_accessed = (xp_flat.size * itemsize + xres.size * 4
                      + N * Cp * HWp_pad * 4
                      + (w1_t.size + w2_t.size) * itemsize + colid.size * 4)

    # VMEM budget from the actual footprint: double-buffered grid tiles +
    # scratch + headroom for the f32 register intermediates.
    tile_bytes = (Cp * P_in * itemsize + 2 * Cp * HWp_pad * 4
                  + 2 * 3 * Cp * 3 * Cp * itemsize + HWp_pad * 4)
    scratch_bytes = Cp * P_in * itemsize + 3 * Cp * Wslab * itemsize
    vmem_est = 2 * tile_bytes + scratch_bytes + 4 * Cp * HWp_pad * 4
    vmem_limit = int(min(max(vmem_est * 5 // 4 + (2 << 20), 16 << 20), 100 << 20))
    # TODO(synk): for very large C*H*W (footprint > ~48 MiB) add a row-block grid
    # axis with a 1-row halo so the whole-sample-resident scheme also fits v7x's
    # 64 MiB VMEM.

    out_flat = pl.pallas_call(
        kernel,
        out_shape=jax.ShapeDtypeStruct((N, Cp, HWp_pad), x.dtype),
        grid=(N,),
        in_specs=[
            pl.BlockSpec((1, HWp_pad), lambda n: (0, 0)),            # column ids
            pl.BlockSpec((None, Cp, P_in), lambda n: (n, 0, 0)),     # padded input
            pl.BlockSpec((3, Cp, 3 * Cp), lambda n: (0, 0, 0)),      # w1 folded taps
            pl.BlockSpec((3, Cp, 3 * Cp), lambda n: (0, 0, 0)),      # w2 folded taps
            pl.BlockSpec((None, Cp, HWp_pad), lambda n: (n, 0, 0)),  # residual
        ],
        out_specs=pl.BlockSpec((None, Cp, HWp_pad), lambda n: (n, 0, 0)),
        scratch_shapes=[pltpu.VMEM((Cp, P_in), compute_dtype),       # padded h1
                        pltpu.VMEM((3 * Cp, Wslab), compute_dtype)], # tap slab
        compiler_params=pltpu.CompilerParams(
            dimension_semantics=("parallel",),
            vmem_limit_bytes=vmem_limit),
        cost_estimate=pl.CostEstimate(flops=int(flops),
                                      transcendentals=2 * N * Cp,
                                      bytes_accessed=int(bytes_accessed)),
    )(colid, xp_flat, w1_t, w2_t, xres)

    # Drop padded channels and the dead columns of the stride-Wp layout.
    return out_flat[:, :C, :HWp].reshape(N, C, H, Wp)[:, :, :, :W]


# --------------------------- pure-JAX reference -------------------------------
def _ref_forward(x, w1, b1, w2, b2):
    def conv(inp, w, b):
        xp = jnp.pad(inp, ((0, 0), (0, 0), (1, 1), (1, 1)), mode="reflect")
        y = jax.lax.conv_general_dilated(
            xp, w, window_strides=(1, 1), padding="VALID",
            dimension_numbers=("NCHW", "OIHW", "NCHW"),
            precision=jax.lax.Precision.HIGHEST)
        return y + b[None, :, None, None]

    def inorm(y):
        m = y.mean(axis=(2, 3), keepdims=True)
        v = ((y - m) ** 2).mean(axis=(2, 3), keepdims=True)
        return (y - m) / jnp.sqrt(v + EPS)

    h = jnp.maximum(inorm(conv(x, w1, b1)), 0.0)
    return x + inorm(conv(h, w2, b2))


# ---------------------------------- main --------------------------------------
if __name__ == "__main__":
    N, C, H, W = 2, 4, 16, 16

    key = jax.random.PRNGKey(0)
    kx, kw1, kb1, kw2, kb2 = jax.random.split(key, 5)

    x = jax.random.normal(kx, (N, C, H, W), dtype=jnp.float32)
    w1 = 0.1 * jax.random.normal(kw1, (C, C, 3, 3), dtype=jnp.float32)
    b1 = 0.1 * jax.random.normal(kb1, (C,), dtype=jnp.float32)
    w2 = 0.1 * jax.random.normal(kw2, (C, C, 3, 3), dtype=jnp.float32)
    b2 = 0.1 * jax.random.normal(kb2, (C,), dtype=jnp.float32)

    ref = jax.block_until_ready(_ref_forward(x, w1, b1, w2, b2))

    # Default fast path: bf16 operands on the MXU, f32 accumulation/norms.
    out_bf16 = jax.block_until_ready(jax.jit(residual_block)(x, w1, b1, w2, b2))
    # f32 compute path for a tight numerical check.
    run_f32 = jax.jit(functools.partial(residual_block,
                                        compute_dtype=jnp.float32))
    out_f32 = jax.block_until_ready(run_f32(x, w1, b1, w2, b2))

    assert out_bf16.shape == (N, C, H, W)
    assert out_f32.shape == (N, C, H, W)
    assert bool(jnp.all(jnp.isfinite(out_bf16)))
    assert bool(jnp.all(jnp.isfinite(out_f32)))
    err_f32 = float(jnp.max(jnp.abs(out_f32 - ref)))
    err_bf16 = float(jnp.max(jnp.abs(out_bf16 - ref)))
    assert err_f32 < 1e-2, f"f32 mismatch vs reference: {err_f32}"
    assert err_bf16 < 1e-1, f"bf16 mismatch vs reference: {err_bf16}"

    print("KERNEL_OK")
</pallas_src>

<mosaic_0001>
module attributes {stable_mosaic.version = 11 : i64} {
  func.func @_fused_resblock_kernel(%arg0: i32, %arg1: memref<1x384xi32, #tpu.memory_space<vmem>>, %arg2: memref<1x8x640xbf16, #tpu.memory_space<vmem>>, %arg3: memref<3x8x24xbf16, #tpu.memory_space<vmem>>, %arg4: memref<3x8x24xbf16, #tpu.memory_space<vmem>>, %arg5: memref<1x8x384xf32, #tpu.memory_space<vmem>>, %arg6: memref<1x8x384xf32, #tpu.memory_space<vmem>>, %arg7: memref<8x640xbf16, #tpu.memory_space<vmem>>, %arg8: memref<24x512xbf16, #tpu.memory_space<vmem>>) attributes {dimension_semantics = [#tpu.dimension_semantics<parallel>], iteration_bounds = array<i64: 2>, scalar_prefetch = 0 : i64, scratch_operands = 2 : i64, tpu.core_type = #tpu.core_type<tc>, window_params = [{pipeline_mode = #tpu.pipeline_mode<synchronous>, transform_indices = @transform_0, window_bounds = array<i64: 1, 384>}, {transform_indices = @transform_1, window_bounds = array<i64: 1, 8, 640>}, {pipeline_mode = #tpu.pipeline_mode<synchronous>, transform_indices = @transform_2, window_bounds = array<i64: 3, 8, 24>}, {pipeline_mode = #tpu.pipeline_mode<synchronous>, transform_indices = @transform_3, window_bounds = array<i64: 3, 8, 24>}, {transform_indices = @transform_4, window_bounds = array<i64: 1, 8, 384>}, {transform_indices = @transform_5, window_bounds = array<i64: 1, 8, 384>}]} {
    %c0 = arith.constant 0 : index
    %c0_0 = arith.constant 0 : index
    %0 = vector.load %arg1[%c0, %c0_0] : memref<1x384xi32, #tpu.memory_space<vmem>>, vector<1x384xi32>
    %c16_i32 = arith.constant 16 : i32
    %1 = vector.broadcast %c16_i32 : i32 to vector<1x384xi32>
    %2 = arith.cmpi slt, %0, %1 : vector<1x384xi32>
    %c0_i32 = arith.constant 0 : i32
    %3 = vector.broadcast %c0_i32 : i32 to vector<1x384xi32>
    %4 = arith.cmpi eq, %0, %3 : vector<1x384xi32>
    %c17_i32 = arith.constant 17 : i32
    %5 = vector.broadcast %c17_i32 : i32 to vector<1x384xi32>
    %6 = arith.cmpi eq, %0, %5 : vector<1x384xi32>
    %c0_1 = arith.constant 0 : index
    %c0_2 = arith.constant 0 : index
    %c0_3 = arith.constant 0 : index
    %7 = vector.load %arg2[%c0_1, %c0_2, %c0_3] : memref<1x8x640xbf16, #tpu.memory_space<vmem>>, vector<1x8x512xbf16>
    %8 = vector.shape_cast %7 : vector<1x8x512xbf16> to vector<8x512xbf16>
    %c0_4 = arith.constant 0 : index
    %c0_5 = arith.constant 0 : index
    %9 = vector.load %arg8[%c0_4, %c0_5] : memref<24x512xbf16, #tpu.memory_space<vmem>>, vector<8x512xbf16>
    tpu.vector_store %arg8[%c0_4, %c0_5], %8 {strides = array<i32>} : memref<24x512xbf16, #tpu.memory_space<vmem>>, vector<8x512xbf16>,
    %c0_6 = arith.constant 0 : index
    %c0_7 = arith.constant 0 : index
    %c1 = arith.constant 1 : index
    %10 = vector.load %arg2[%c0_6, %c0_7, %c1] : memref<1x8x640xbf16, #tpu.memory_space<vmem>>, vector<1x8x512xbf16>
    %11 = vector.shape_cast %10 : vector<1x8x512xbf16> to vector<8x512xbf16>
    %c8 = arith.constant 8 : index
    %c0_8 = arith.constant 0 : index
    %12 = vector.load %arg8[%c8, %c0_8] : memref<24x512xbf16, #tpu.memory_space<vmem>>, vector<8x512xbf16>
    tpu.vector_store %arg8[%c8, %c0_8], %11 {strides = array<i32>} : memref<24x512xbf16, #tpu.memory_space<vmem>>, vector<8x512xbf16>,
    %c0_9 = arith.constant 0 : index
    %c0_10 = arith.constant 0 : index
    %c2 = arith.constant 2 : index
    %13 = vector.load %arg2[%c0_9, %c0_10, %c2] : memref<1x8x640xbf16, #tpu.memory_space<vmem>>, vector<1x8x512xbf16>
    %14 = vector.shape_cast %13 : vector<1x8x512xbf16> to vector<8x512xbf16>
    %c16 = arith.constant 16 : index
    %c0_11 = arith.constant 0 : index
    %15 = vector.load %arg8[%c16, %c0_11] : memref<24x512xbf16, #tpu.memory_space<vmem>>, vector<8x512xbf16>
    tpu.vector_store %arg8[%c16, %c0_11], %14 {strides = array<i32>} : memref<24x512xbf16, #tpu.memory_space<vmem>>, vector<8x512xbf16>,
    %c0_12 = arith.constant 0 : index
    %c0_13 = arith.constant 0 : index
    %16 = vector.load %arg8[%c0_12, %c0_13] : memref<24x512xbf16, #tpu.memory_space<vmem>>, vector<24x384xbf16>
    %c0_14 = arith.constant 0 : index
    %c0_15 = arith.constant 0 : index
    %c0_16 = arith.constant 0 : index
    %17 = vector.load %arg3[%c0_14, %c0_15, %c0_16] : memref<3x8x24xbf16, #tpu.memory_space<vmem>>, vector<1x8x24xbf16>
    %18 = vector.shape_cast %17 : vector<1x8x24xbf16> to vector<8x24xbf16>
    %cst = arith.constant dense<0.000000e+00> : vector<8x384xf32>
    %19 = tpu.matmul %18, %16, %cst {dimension_numbers = #tpu.dot_dimension_numbers<[1], [0], [0], [1], [0, 0, 1, 1], [], []>} : vector<8x24xbf16>, vector<24x384xbf16>, vector<8x384xf32> -> vector<8x384xf32>
    %c0_17 = arith.constant 0 : index
    %c18 = arith.constant 18 : index
    %20 = vector.load %arg8[%c0_17, %c18] : memref<24x512xbf16, #tpu.memory_space<vmem>>, vector<24x384xbf16>
    %c1_18 = arith.constant 1 : index
    %c0_19 = arith.constant 0 : index
    %c0_20 = arith.constant 0 : index
    %21 = vector.load %arg3[%c1_18, %c0_19, %c0_20] : memref<3x8x24xbf16, #tpu.memory_space<vmem>>, vector<1x8x24xbf16>
    %22 = vector.shape_cast %21 : vector<1x8x24xbf16> to vector<8x24xbf16>
    %cst_21 = arith.constant dense<0.000000e+00> : vector<8x384xf32>
    %23 = tpu.matmul %22, %20, %cst_21 {dimension_numbers = #tpu.dot_dimension_numbers<[1], [0], [0], [1], [0, 0, 1, 1], [], []>} : vector<8x24xbf16>, vector<24x384xbf16>, vector<8x384xf32> -> vector<8x384xf32>
    %24 = arith.addf %19, %23 : vector<8x384xf32>
    %c0_22 = arith.constant 0 : index
    %c36 = arith.constant 36 : index
    %25 = vector.load %arg8[%c0_22, %c36] : memref<24x512xbf16, #tpu.memory_space<vmem>>, vector<24x384xbf16>
    %c2_23 = arith.constant 2 : index
    %c0_24 = arith.constant 0 : index
    %c0_25 = arith.constant 0 : index
    %26 = vector.load %arg3[%c2_23, %c0_24, %c0_25] : memref<3x8x24xbf16, #tpu.memory_space<vmem>>, vector<1x8x24xbf16>
    %27 = vector.shape_cast %26 : vector<1x8x24xbf16> to vector<8x24xbf16>
    %cst_26 = arith.constant dense<0.000000e+00> : vector<8x384xf32>
    %28 = tpu.matmul %27, %25, %cst_26 {dimension_numbers = #tpu.dot_dimension_numbers<[1], [0], [0], [1], [0, 0, 1, 1], [], []>} : vector<8x24xbf16>, vector<24x384xbf16>, vector<8x384xf32> -> vector<8x384xf32>
    %29 = arith.addf %24, %28 : vector<8x384xf32>
    %cst_27 = arith.constant 0.000000e+00 : f32
    %30 = vector.shape_cast %2 : vector<1x384xi1> to vector<1x384xi1>
    %31 = vector.broadcast %30 : vector<1x384xi1> to vector<8x384xi1>
    %32 = vector.broadcast %cst_27 : f32 to vector<8x384xf32>
    %33 = arith.select %31, %29, %32 : vector<8x384xi1>, vector<8x384xf32>
    %cst_28 = arith.constant dense<0.000000e+00> : vector<8xf32>
    %34 = vector.multi_reduction <add>, %33, %cst_28 [1] : vector<8x384xf32> to vector<8xf32>
    %35 = vector.shape_cast %34 : vector<8xf32> to vector<8x1xf32>
    %36 = arith.mulf %33, %33 : vector<8x384xf32>
    %cst_29 = arith.constant dense<0.000000e+00> : vector<8xf32>
    %37 = vector.multi_reduction <add>, %36, %cst_29 [1] : vector<8x384xf32> to vector<8xf32>
    %38 = vector.shape_cast %37 : vector<8xf32> to vector<8x1xf32>
    %cst_30 = arith.constant 3.906250e-03 : f32
    %39 = vector.broadcast %cst_30 : f32 to vector<8x1xf32>
    %40 = arith.mulf %35, %39 : vector<8x1xf32>
    %cst_31 = arith.constant 3.906250e-03 : f32
    %41 = vector.broadcast %cst_31 : f32 to vector<8x1xf32>
    %42 = arith.mulf %38, %41 : vector<8x1xf32>
    %43 = arith.mulf %40, %40 : vector<8x1xf32>
    %44 = arith.subf %42, %43 : vector<8x1xf32>
    %45 = vector.broadcast %40 : vector<8x1xf32> to vector<8x384xf32>
    %46 = arith.subf %29, %45 : vector<8x384xf32>
    %cst_32 = arith.constant 9.99999974E-6 : f32
    %47 = vector.broadcast %cst_32 : f32 to vector<8x1xf32>
    %48 = arith.addf %44, %47 : vector<8x1xf32>
    %49 = math.rsqrt %48 : vector<8x1xf32>
    %50 = vector.broadcast %49 : vector<8x1xf32> to vector<8x384xf32>
    %51 = arith.mulf %46, %50 : vector<8x384xf32>
    %cst_33 = arith.constant 0.000000e+00 : f32
    %52 = vector.broadcast %cst_33 : f32 to vector<8x384xf32>
    %53 = arith.maximumf %51, %52 : vector<8x384xf32>
    %c1_i32 = arith.constant 1 : i32
    %54 = tpu.dynamic_rotate %53 by %c1_i32 dim 1 : vector<8x384xf32>, i32 -> vector<8x384xf32>
    %c383_i32 = arith.constant 383 : i32
    %55 = tpu.dynamic_rotate %53 by %c383_i32 dim 1 : vector<8x384xf32>, i32 -> vector<8x384xf32>
    %c3_i32 = arith.constant 3 : i32
    %56 = tpu.dynamic_rotate %53 by %c3_i32 dim 1 : vector<8x384xf32>, i32 -> vector<8x384xf32>
    %57 = vector.shape_cast %6 : vector<1x384xi1> to vector<1x384xi1>
    %58 = vector.broadcast %57 : vector<1x384xi1> to vector<8x384xi1>
    %59 = arith.select %58, %56, %54 : vector<8x384xi1>, vector<8x384xf32>
    %60 = vector.shape_cast %4 : vector<1x384xi1> to vector<1x384xi1>
    %61 = vector.broadcast %60 : vector<1x384xi1> to vector<8x384xi1>
    %62 = arith.select %61, %55, %59 : vector<8x384xi1>, vector<8x384xf32>
    %63 = arith.truncf %62 : vector<8x384xf32> to vector<8x384xbf16>
    %c0_34 = arith.constant 0 : index
    %c18_35 = arith.constant 18 : index
    %64 = vector.load %arg7[%c0_34, %c18_35] : memref<8x640xbf16, #tpu.memory_space<vmem>>, vector<8x384xbf16>
    tpu.vector_store %arg7[%c0_34, %c18_35], %63 {strides = array<i32>} : memref<8x640xbf16, #tpu.memory_space<vmem>>, vector<8x384xbf16>,
    %cst_36 = arith.constant 0.000000e+00 : bf16
    %65 = vector.broadcast %cst_36 : bf16 to vector<8x316xbf16>
    %c0_37 = arith.constant 0 : index
    %c324 = arith.constant 324 : index
    %66 = vector.load %arg7[%c0_37, %c324] : memref<8x640xbf16, #tpu.memory_space<vmem>>, vector<8x316xbf16>
    tpu.vector_store %arg7[%c0_37, %c324], %65 {strides = array<i32>} : memref<8x640xbf16, #tpu.memory_space<vmem>>, vector<8x316xbf16>,
    %c0_38 = arith.constant 0 : index
    %c36_39 = arith.constant 36 : index
    %67 = vector.load %arg7[%c0_38, %c36_39] : memref<8x640xbf16, #tpu.memory_space<vmem>>, vector<8x18xbf16>
    %c0_40 = arith.constant 0 : index
    %c0_41 = arith.constant 0 : index
    %68 = vector.load %arg7[%c0_40, %c0_41] : memref<8x640xbf16, #tpu.memory_space<vmem>>, vector<8x18xbf16>
    tpu.vector_store %arg7[%c0_40, %c0_41], %67 {strides = array<i32>} : memref<8x640xbf16, #tpu.memory_space<vmem>>, vector<8x18xbf16>,
    %c0_42 = arith.constant 0 : index
    %c270 = arith.constant 270 : index
    %69 = vector.load %arg7[%c0_42, %c270] : memref<8x640xbf16, #tpu.memory_space<vmem>>, vector<8x18xbf16>
    %c0_43 = arith.constant 0 : index
    %c306 = arith.constant 306 : index
    %70 = vector.load %arg7[%c0_43, %c306] : memref<8x640xbf16, #tpu.memory_space<vmem>>, vector<8x18xbf16>
    tpu.vector_store %arg7[%c0_43, %c306], %69 {strides = array<i32>} : memref<8x640xbf16, #tpu.memory_space<vmem>>, vector<8x18xbf16>,
    %c0_44 = arith.constant 0 : index
    %c0_45 = arith.constant 0 : index
    %71 = vector.load %arg7[%c0_44, %c0_45] : memref<8x640xbf16, #tpu.memory_space<vmem>>, vector<8x512xbf16>
    %c0_46 = arith.constant 0 : index
    %c0_47 = arith.constant 0 : index
    %72 = vector.load %arg8[%c0_46, %c0_47] : memref<24x512xbf16, #tpu.memory_space<vmem>>, vector<8x512xbf16>
    tpu.vector_store %arg8[%c0_46, %c0_47], %71 {strides = array<i32>} : memref<24x512xbf16, #tpu.memory_space<vmem>>, vector<8x512xbf16>,
    %c0_48 = arith.constant 0 : index
    %c1_49 = arith.constant 1 : index
    %73 = vector.load %arg7[%c0_48, %c1_49] : memref<8x640xbf16, #tpu.memory_space<vmem>>, vector<8x512xbf16>
    %c8_50 = arith.constant 8 : index
    %c0_51 = arith.constant 0 : index
    %74 = vector.load %arg8[%c8_50, %c0_51] : memref<24x512xbf16, #tpu.memory_space<vmem>>, vector<8x512xbf16>
    tpu.vector_store %arg8[%c8_50, %c0_51], %73 {strides = array<i32>} : memref<24x512xbf16, #tpu.memory_space<vmem>>, vector<8x512xbf16>,
    %c0_52 = arith.constant 0 : index
    %c2_53 = arith.constant 2 : index
    %75 = vector.load %arg7[%c0_52, %c2_53] : memref<8x640xbf16, #tpu.memory_space<vmem>>, vector<8x512xbf16>
    %c16_54 = arith.constant 16 : index
    %c0_55 = arith.constant 0 : index
    %76 = vector.load %arg8[%c16_54, %c0_55] : memref<24x512xbf16, #tpu.memory_space<vmem>>, vector<8x512xbf16>
    tpu.vector_store %arg8[%c16_54, %c0_55], %75 {strides = array<i32>} : memref<24x512xbf16, #tpu.memory_space<vmem>>, vector<8x512xbf16>,
    %c0_56 = arith.constant 0 : index
    %c0_57 = arith.constant 0 : index
    %77 = vector.load %arg8[%c0_56, %c0_57] : memref<24x512xbf16, #tpu.memory_space<vmem>>, vector<24x384xbf16>
    %c0_58 = arith.constant 0 : index
    %c0_59 = arith.constant 0 : index
    %c0_60 = arith.constant 0 : index
    %78 = vector.load %arg4[%c0_58, %c0_59, %c0_60] : memref<3x8x24xbf16, #tpu.memory_space<vmem>>, vector<1x8x24xbf16>
    %79 = vector.shape_cast %78 : vector<1x8x24xbf16> to vector<8x24xbf16>
    %cst_61 = arith.constant dense<0.000000e+00> : vector<8x384xf32>
    %80 = tpu.matmul %79, %77, %cst_61 {dimension_numbers = #tpu.dot_dimension_numbers<[1], [0], [0], [1], [0, 0, 1, 1], [], []>} : vector<8x24xbf16>, vector<24x384xbf16>, vector<8x384xf32> -> vector<8x384xf32>
    %c0_62 = arith.constant 0 : index
    %c18_63 = arith.constant 18 : index
    %81 = vector.load %arg8[%c0_62, %c18_63] : memref<24x512xbf16, #tpu.memory_space<vmem>>, vector<24x384xbf16>
    %c1_64 = arith.constant 1 : index
    %c0_65 = arith.constant 0 : index
    %c0_66 = arith.constant 0 : index
    %82 = vector.load %arg4[%c1_64, %c0_65, %c0_66] : memref<3x8x24xbf16, #tpu.memory_space<vmem>>, vector<1x8x24xbf16>
    %83 = vector.shape_cast %82 : vector<1x8x24xbf16> to vector<8x24xbf16>
    %cst_67 = arith.constant dense<0.000000e+00> : vector<8x384xf32>
    %84 = tpu.matmul %83, %81, %cst_67 {dimension_numbers = #tpu.dot_dimension_numbers<[1], [0], [0], [1], [0, 0, 1, 1], [], []>} : vector<8x24xbf16>, vector<24x384xbf16>, vector<8x384xf32> -> vector<8x384xf32>
    %85 = arith.addf %80, %84 : vector<8x384xf32>
    %c0_68 = arith.constant 0 : index
    %c36_69 = arith.constant 36 : index
    %86 = vector.load %arg8[%c0_68, %c36_69] : memref<24x512xbf16, #tpu.memory_space<vmem>>, vector<24x384xbf16>
    %c2_70 = arith.constant 2 : index
    %c0_71 = arith.constant 0 : index
    %c0_72 = arith.constant 0 : index
    %87 = vector.load %arg4[%c2_70, %c0_71, %c0_72] : memref<3x8x24xbf16, #tpu.memory_space<vmem>>, vector<1x8x24xbf16>
    %88 = vector.shape_cast %87 : vector<1x8x24xbf16> to vector<8x24xbf16>
    %cst_73 = arith.constant dense<0.000000e+00> : vector<8x384xf32>
    %89 = tpu.matmul %88, %86, %cst_73 {dimension_numbers = #tpu.dot_dimension_numbers<[1], [0], [0], [1], [0, 0, 1, 1], [], []>} : vector<8x24xbf16>, vector<24x384xbf16>, vector<8x384xf32> -> vector<8x384xf32>
    %90 = arith.addf %85, %89 : vector<8x384xf32>
    %cst_74 = arith.constant 0.000000e+00 : f32
    %91 = vector.shape_cast %2 : vector<1x384xi1> to vector<1x384xi1>
    %92 = vector.broadcast %91 : vector<1x384xi1> to vector<8x384xi1>
    %93 = vector.broadcast %cst_74 : f32 to vector<8x384xf32>
    %94 = arith.select %92, %90, %93 : vector<8x384xi1>, vector<8x384xf32>
    %cst_75 = arith.constant dense<0.000000e+00> : vector<8xf32>
    %95 = vector.multi_reduction <add>, %94, %cst_75 [1] : vector<8x384xf32> to vector<8xf32>
    %96 = vector.shape_cast %95 : vector<8xf32> to vector<8x1xf32>
    %97 = arith.mulf %94, %94 : vector<8x384xf32>
    %cst_76 = arith.constant dense<0.000000e+00> : vector<8xf32>
    %98 = vector.multi_reduction <add>, %97, %cst_76 [1] : vector<8x384xf32> to vector<8xf32>
    %99 = vector.shape_cast %98 : vector<8xf32> to vector<8x1xf32>
    %cst_77 = arith.constant 3.906250e-03 : f32
    %100 = vector.broadcast %cst_77 : f32 to vector<8x1xf32>
    %101 = arith.mulf %96, %100 : vector<8x1xf32>
    %cst_78 = arith.constant 3.906250e-03 : f32
    %102 = vector.broadcast %cst_78 : f32 to vector<8x1xf32>
    %103 = arith.mulf %99, %102 : vector<8x1xf32>
    %104 = arith.mulf %101, %101 : vector<8x1xf32>
    %105 = arith.subf %103, %104 : vector<8x1xf32>
    %106 = vector.broadcast %101 : vector<8x1xf32> to vector<8x384xf32>
    %107 = arith.subf %90, %106 : vector<8x384xf32>
    %cst_79 = arith.constant 9.99999974E-6 : f32
    %108 = vector.broadcast %cst_79 : f32 to vector<8x1xf32>
    %109 = arith.addf %105, %108 : vector<8x1xf32>
    %110 = math.rsqrt %109 : vector<8x1xf32>
    %111 = vector.broadcast %110 : vector<8x1xf32> to vector<8x384xf32>
    %112 = arith.mulf %107, %111 : vector<8x384xf32>
    %c0_80 = arith.constant 0 : index
    %c0_81 = arith.constant 0 : index
    %c0_82 = arith.constant 0 : index
    %113 = vector.load %arg5[%c0_80, %c0_81, %c0_82] : memref<1x8x384xf32, #tpu.memory_space<vmem>>, vector<1x8x384xf32>
    %114 = vector.shape_cast %113 : vector<1x8x384xf32> to vector<8x384xf32>
    %115 = arith.addf %112, %114 : vector<8x384xf32>
    %c0_83 = arith.constant 0 : index
    %c0_84 = arith.constant 0 : index
    %c0_85 = arith.constant 0 : index
    %116 = vector.load %arg6[%c0_83, %c0_84, %c0_85] : memref<1x8x384xf32, #tpu.memory_space<vmem>>, vector<1x8x384xf32>
    %117 = vector.shape_cast %116 : vector<1x8x384xf32> to vector<8x384xf32>
    %118 = vector.shape_cast %115 : vector<8x384xf32> to vector<1x8x384xf32>
    tpu.vector_store %arg6[%c0_83, %c0_84, %c0_85], %118 {strides = array<i32>} : memref<1x8x384xf32, #tpu.memory_space<vmem>>, vector<1x8x384xf32>,
    return
  }
  func.func @transform_0(%arg0: i32) -> (i32, i32) {
    %c0_i32 = arith.constant 0 : i32
    %c0_i32_0 = arith.constant 0 : i32
    %c0_i32_1 = arith.constant 0 : i32
    return %c0_i32, %c0_i32_0 : i32, i32
  }
  func.func @transform_1(%arg0: i32) -> (i32, i32, i32) {
    %c0_i32 = arith.constant 0 : i32
    %c0_i32_0 = arith.constant 0 : i32
    %c0_i32_1 = arith.constant 0 : i32
    return %arg0, %c0_i32, %c0_i32_0 : i32, i32, i32
  }
  func.func @transform_2(%arg0: i32) -> (i32, i32, i32) {
    %c0_i32 = arith.constant 0 : i32
    %c0_i32_0 = arith.constant 0 : i32
    %c0_i32_1 = arith.constant 0 : i32
    %c0_i32_2 = arith.constant 0 : i32
    return %c0_i32, %c0_i32_0, %c0_i32_1 : i32, i32, i32
  }
  func.func @transform_3(%arg0: i32) -> (i32, i32, i32) {
    %c0_i32 = arith.constant 0 : i32
    %c0_i32_0 = arith.constant 0 : i32
    %c0_i32_1 = arith.constant 0 : i32
    %c0_i32_2 = arith.constant 0 : i32
    return %c0_i32, %c0_i32_0, %c0_i32_1 : i32, i32, i32
  }
  func.func @transform_4(%arg0: i32) -> (i32, i32, i32) {
    %c0_i32 = arith.constant 0 : i32
    %c0_i32_0 = arith.constant 0 : i32
    %c0_i32_1 = arith.constant 0 : i32
    return %arg0, %c0_i32, %c0_i32_0 : i32, i32, i32
  }
  func.func @transform_5(%arg0: i32) -> (i32, i32, i32) {
    %c0_i32 = arith.constant 0 : i32
    %c0_i32_0 = arith.constant 0 : i32
    %c0_i32_1 = arith.constant 0 : i32
    return %arg0, %c0_i32, %c0_i32_0 : i32, i32, i32
  }
}

</mosaic_0001>

<llo_original>
// kernel: residual_block.1
$region0: #{residual_block.1}
  #allocation0 [shape = 'u32[]', space=smem, size = 0x4, offset = 0x4, fixed_abs, tag = 'smem constant byte address 0x4 - core index']
  #allocation1 [shape = 'u32[144,128]{1,0:T(1,128)}', space=vmem, size = 0x12000, scoped, tag = 'internal scratch']
  #allocation2 [shape = 'bf16[8,640]{1,0:T(8,128)(2,1)}', space=vmem, size = 0x2800, scoped, tag = 'scratch operand']
  #allocation3 [shape = 'bf16[24,512]{1,0:T(8,128)(2,1)}', space=vmem, size = 0x6000, scoped, tag = 'scratch operand']
  %s0 = inlined_call_operand.vmem [shape: s32[1,384], index: 0, kind: input, shape index: {}]
  %s1 = inlined_call_operand.vmem [shape: bf16[2,8,640], index: 1, kind: input, shape index: {}]
  %s2 = inlined_call_operand.vmem [shape: bf16[3,8,24], index: 2, kind: input, shape index: {}]
  %s3 = inlined_call_operand.vmem [shape: bf16[3,8,24], index: 3, kind: input, shape index: {}]
  %s4 = inlined_call_operand.vmem [shape: f32[2,8,384], index: 4, kind: input, shape index: {}]
  %s5 = inlined_call_operand.vmem [shape: f32[2,8,384], index: 5, kind: output, shape index: {}]
  %s6 = sld [smem:[#allocation0]]
  $region53: #{residual_block.1} parent=0
    _
  %s8 = ssub.s32 1, %s6
  %s9 = scalar_select 0, %s8, %s6
  loop: start=0, step=1, limit=4
  $region2: #{residual_block.1} parent=0 // loop_pre_header
    _
  $region3: #{residual_block.1} parent=0 // loop_header
    %s11 = sphi 0, %s15
    %p12 = scmp.ge.s32.totalorder %s11, 4
    %s19 = sphi 0, %s19
    %s21 = sphi 0, %s19
    %s22 = sphi 0, %s21
    %s36 = sphi 0, %s22
    %s42 = sphi 0, %s44
    %s45 = sphi 0, %s42
    %s46 = sphi 0, %s45
    %s62 = sphi 0, %s46
    %s66 = sphi 0, %s66
    %s68 = sphi 0, %s66
    %s69 = sphi 0, %s68
    %s83 = sphi 0, %s69
    %s87 = sphi 0, %s87
    %s89 = sphi 0, %s87
    %s90 = sphi 0, %s89
    %s104 = sphi 0, %s90
    %s110 = sphi 0, %s112
    %s113 = sphi 0, %s110
    %s114 = sphi 0, %s113
    %s130 = sphi 0, %s114
    %s136 = sphi 0, %s138
    %s139 = sphi 0, %s136
    %s140 = sphi 0, %s139
    %s156 = sphi 0, %s140
  $region4: #{residual_block.1} parent=0 // loop_header_branch
    %14 = sbr.rel (%p12) target = $region8
  $region5: #{residual_block.1} parent=0 // loop_body
    %s16 = ssub.s32 %s11, 1
    %s17 = ssub.s32 %s11, 2
    %s18 = sadd.s32 %s11, 1
    %s20 = sadd.s32 %s19, 1
    %p23 = scmp.eq.s32.totalorder %s11, 1
    %p24 = scmp.ne.s32.totalorder %s19, %s21
    %p25 = scmp.eq.s32.totalorder %s11, 0
    %p26 = por %p24, %p25
    %p27 = scmp.ne.s32.totalorder %s19, %s21
    %p28 = scmp.eq.s32.totalorder %s16, 1
    %p29 = por %p27, %p28
    %p30 = scmp.ne.s32.totalorder %s21, %s22
    %p31 = scmp.eq.s32.totalorder %s16, 0
    %p32 = por %p30, %p31
    %p33 = scmp.ne.s32.totalorder %s21, %s22
    %p34 = scmp.eq.s32.totalorder %s17, 1
    %p35 = por %p33, %p34
    %p37 = scmp.ne.s32.totalorder %s22, %s36
    %p38 = scmp.eq.s32.totalorder %s17, 0
    %p39 = por %p37, %p38
    %s40 = ssub.s32 %s11, %s18
    %p41 = scmp.eq.s32.totalorder %s40, 0
    %s43 = sadd.s32 %s42, 1
    %s44 = scalar_select %p41, %s42, %s43
    %p47 = pneg %p41
    %p48 = scmp.eq.s32.totalorder %s11, 1
    %p49 = por %p47, %p48
    %p50 = scmp.ne.s32.totalorder %s42, %s45
    %p51 = scmp.eq.s32.totalorder %s11, 0
    %p52 = por %p50, %p51
    %p53 = scmp.ne.s32.totalorder %s42, %s45
    %p54 = scmp.eq.s32.totalorder %s16, 1
    %p55 = por %p53, %p54
    %p56 = scmp.ne.s32.totalorder %s45, %s46
    %p57 = scmp.eq.s32.totalorder %s16, 0
    %p58 = por %p56, %p57
    %p59 = scmp.ne.s32.totalorder %s45, %s46
    %p60 = scmp.eq.s32.totalorder %s17, 1
    %p61 = por %p59, %p60
    %p63 = scmp.ne.s32.totalorder %s46, %s62
    %p64 = scmp.eq.s32.totalorder %s17, 0
    %p65 = por %p63, %p64
    %s67 = sadd.s32 %s66, 1
    %p70 = scmp.eq.s32.totalorder %s11, 1
    %p71 = scmp.ne.s32.totalorder %s66, %s68
    %p72 = scmp.eq.s32.totalorder %s11, 0
    %p73 = por %p71, %p72
    %p74 = scmp.ne.s32.totalorder %s66, %s68
    %p75 = scmp.eq.s32.totalorder %s16, 1
    %p76 = por %p74, %p75
    %p77 = scmp.ne.s32.totalorder %s68, %s69
    %p78 = scmp.eq.s32.totalorder %s16, 0
    %p79 = por %p77, %p78
    %p80 = scmp.ne.s32.totalorder %s68, %s69
    %p81 = scmp.eq.s32.totalorder %s17, 1
    %p82 = por %p80, %p81
    %p84 = scmp.ne.s32.totalorder %s69, %s83
    %p85 = scmp.eq.s32.totalorder %s17, 0
    %p86 = por %p84, %p85
    %s88 = sadd.s32 %s87, 1
    %p91 = scmp.eq.s32.totalorder %s11, 1
    %p92 = scmp.ne.s32.totalorder %s87, %s89
    %p93 = scmp.eq.s32.totalorder %s11, 0
    %p94 = por %p92, %p93
    %p95 = scmp.ne.s32.totalorder %s87, %s89
    %p96 = scmp.eq.s32.totalorder %s16, 1
    %p97 = por %p95, %p96
    %p98 = scmp.ne.s32.totalorder %s89, %s90
    %p99 = scmp.eq.s32.totalorder %s16, 0
    %p100 = por %p98, %p99
    %p101 = scmp.ne.s32.totalorder %s89, %s90
    %p102 = scmp.eq.s32.totalorder %s17, 1
    %p103 = por %p101, %p102
    %p105 = scmp.ne.s32.totalorder %s90, %s104
    %p106 = scmp.eq.s32.totalorder %s17, 0
    %p107 = por %p105, %p106
    %s108 = ssub.s32 %s11, %s18
    %p109 = scmp.eq.s32.totalorder %s108, 0
    %s111 = sadd.s32 %s110, 1
    %s112 = scalar_select %p109, %s110, %s111
    %p115 = pneg %p109
    %p116 = scmp.eq.s32.totalorder %s11, 1
    %p117 = por %p115, %p116
    %p118 = scmp.ne.s32.totalorder %s110, %s113
    %p119 = scmp.eq.s32.totalorder %s11, 0
    %p120 = por %p118, %p119
    %p121 = scmp.ne.s32.totalorder %s110, %s113
    %p122 = scmp.eq.s32.totalorder %s16, 1
    %p123 = por %p121, %p122
    %p124 = scmp.ne.s32.totalorder %s113, %s114
    %p125 = scmp.eq.s32.totalorder %s16, 0
    %p126 = por %p124, %p125
    %p127 = scmp.ne.s32.totalorder %s113, %s114
    %p128 = scmp.eq.s32.totalorder %s17, 1
    %p129 = por %p127, %p128
    %p131 = scmp.ne.s32.totalorder %s114, %s130
    %p132 = scmp.eq.s32.totalorder %s17, 0
    %p133 = por %p131, %p132
    %s134 = ssub.s32 %s11, %s18
    %p135 = scmp.eq.s32.totalorder %s134, 0
    %s137 = sadd.s32 %s136, 1
    %s138 = scalar_select %p135, %s136, %s137
    %p141 = pneg %p135
    %p142 = scmp.eq.s32.totalorder %s11, 1
    %p143 = por %p141, %p142
    %p144 = scmp.ne.s32.totalorder %s136, %s139
    %p145 = scmp.eq.s32.totalorder %s11, 0
    %p146 = por %p144, %p145
    %p147 = scmp.ne.s32.totalorder %s136, %s139
    %p148 = scmp.eq.s32.totalorder %s16, 1
    %p149 = por %p147, %p148
    %p150 = scmp.ne.s32.totalorder %s139, %s140
    %p151 = scmp.eq.s32.totalorder %s16, 0
    %p152 = por %p150, %p151
    %p153 = scmp.ne.s32.totalorder %s139, %s140
    %p154 = scmp.eq.s32.totalorder %s17, 1
    %p155 = por %p153, %p154
    %p157 = scmp.ne.s32.totalorder %s140, %s156
    %p158 = scmp.eq.s32.totalorder %s17, 0
    %p159 = por %p157, %p158
    %p160 = scmp.le.s32.totalorder 1, %s11
    %p161 = scmp.lt.s32.totalorder %s11, 3
    %p162 = pnand %p160, %p161
    %p163 = pneg %p162
    // Predicated region
    $region9: #{residual_block.1} parent=5 // pred_check
      _
    $region10: #{residual_block.1} parent=5 // pred_check_branch
      %165 = sbr.rel (%p162) target = $region12
    $region11: #{residual_block.1} parent=5 // pred_region
      %s166 = ssub.s32 %s11, 1
      // Predicated region
      $region13: #{residual_block.1} parent=11 // pred_check
        %p167 = pneg %p32
      $region14: #{residual_block.1} parent=11 // pred_check_branch
        %169 = sbr.rel (%p167) target = $region16
      $region15: #{residual_block.1} parent=11 // pred_region
        _
      $region16: #{residual_block.1} parent=11 // pred_fallthru
        _
      // Predicated region
      $region17: #{residual_block.1} parent=11 // pred_check
        %p170 = pneg %p79
      $region18: #{residual_block.1} parent=11 // pred_check_branch
        %172 = sbr.rel (%p170) target = $region20
      $region19: #{residual_block.1} parent=11 // pred_region
        _
      $region20: #{residual_block.1} parent=11 // pred_fallthru
        _
      // Predicated region
      $region21: #{residual_block.1} parent=11 // pred_check
        %p173 = pneg %p100
      $region22: #{residual_block.1} parent=11 // pred_check_branch
        %175 = sbr.rel (%p173) target = $region24
      $region23: #{residual_block.1} parent=11 // pred_region
        _
      $region24: #{residual_block.1} parent=11 // pred_fallthru
        _
    $region12: #{residual_block.1} parent=5 // pred_fallthru
      _
    %p176 = scmp.lt.s32.totalorder %s11, 2
    // Predicated region
    $region25: #{residual_block.1} parent=5 // pred_check
      %p177 = pneg %p176
    $region26: #{residual_block.1} parent=5 // pred_check_branch
      %179 = sbr.rel (%p177) target = $region28
    $region27: #{residual_block.1} parent=5 // pred_region
      // Predicated region
      $region29: #{residual_block.1} parent=27 // pred_check
        %p180 = pneg %p52
      $region30: #{residual_block.1} parent=27 // pred_check_branch
        %182 = sbr.rel (%p180) target = $region32
      $region31: #{residual_block.1} parent=27 // pred_region
        %p183 = scmp.lt.s32.totalorder %s11, 1
        %s184 = scalar_select %p183, %s11, 1
        %s185 = smul.addr %s184, 5
        %s186 = smul.addr %s185, 4
        %s187 = scalar_lea.vmem %s1, %s186
      $region32: #{residual_block.1} parent=27 // pred_fallthru
        _
      // Predicated region
      $region33: #{residual_block.1} parent=27 // pred_check
        %p188 = pneg %p120
      $region34: #{residual_block.1} parent=27 // pred_check_branch
        %190 = sbr.rel (%p188) target = $region36
      $region35: #{residual_block.1} parent=27 // pred_region
        %p191 = scmp.lt.s32.totalorder %s11, 1
        %s192 = scalar_select %p191, %s11, 1
        %s193 = smul.addr %s192, 3
        %s194 = smul.addr %s193, 8
        %s195 = scalar_lea.vmem %s4, %s194
      $region36: #{residual_block.1} parent=27 // pred_fallthru
        _
    $region28: #{residual_block.1} parent=5 // pred_fallthru
      _
    %p196 = scmp.le.s32.totalorder 1, %s11
    %p197 = scmp.lt.s32.totalorder %s11, 3
    %p198 = pnand %p196, %p197
    %p199 = pneg %p198
    // Predicated region
    $region37: #{residual_block.1} parent=5 // pred_check
      _
    $region38: #{residual_block.1} parent=5 // pred_check_branch
      %201 = sbr.rel (%p198) target = $region40
    $region39: #{residual_block.1} parent=5 // pred_region
      %s202 = ssub.s32 %s11, 1
      %p203 = pneg %p32
      %p204 = pneg %p29
      %p205 = scmp.lt.s32.totalorder %s16, 1
      %s206 = scalar_select %p205, %s16, 1
      %s207 = smul.addr %s206, 5
      %s208 = smul.addr %s207, 4
      %s209 = scalar_lea.vmem %s1, %s208
      %p210 = pneg %p58
      %p211 = pneg %p55
      %p212 = pneg %p79
      %p213 = pneg %p76
      %p214 = pneg %p100
      %p215 = pneg %p97
      %p216 = scmp.lt.s32.totalorder %s16, 1
      %s217 = scalar_select %p216, %s16, 1
      %s218 = smul.addr %s217, 3
      %s219 = smul.addr %s218, 8
      %s220 = scalar_lea.vmem %s4, %s219
      %p221 = pneg %p126
      %p222 = pneg %p123
      %p223 = pneg %p152
      %p224 = pneg %p149
      %p225 = scmp.lt.s32.totalorder %s16, 1
      %s226 = scalar_select %p225, %s16, 1
      %s227 = smul.addr %s226, 3
      %s228 = smul.addr %s227, 8
      %s229 = scalar_lea.vmem %s5, %s228
      %p230 = scmp.lt.s32.totalorder %s16, 1
      %s231 = scalar_select %p230, %s16, 1
      %s232 = smul.addr %s231, 5
      %s233 = smul.addr %s232, 4
      %s234 = scalar_lea.vmem %s1, %s233
      %p235 = scmp.lt.s32.totalorder %s16, 1
      %s236 = scalar_select %p235, %s16, 1
      %s237 = smul.addr %s236, 3
      %s238 = smul.addr %s237, 8
      %s239 = scalar_lea.vmem %s4, %s238
      %p240 = scmp.lt.s32.totalorder %s16, 1
      %s241 = scalar_select %p240, %s16, 1
      %s242 = smul.addr %s241, 3
      %s243 = smul.addr %s242, 8
      %s244 = scalar_lea.vmem %s5, %s243
      %v246 = vld [vmem:[%s0] sm:$0x7]
      %vm247 = vcmp.lt.s32.totalorder %v246, 16
      %vm248 = vcmp.eq.s32.totalorder %v246, 0
      %vm249 = vcmp.eq.s32.totalorder %v246, 17
      %v250 = vld [vmem:[%s234] sm:$0xff]
      %v251 = vld [vmem:[%s234 + $0x8] sm:$0xff]
      %252 = vst [vmem:[#allocation3] sm:$0xff] %v250
      %253 = vst [vmem:[#allocation3 + $0x8] sm:$0xff] %v251
      %v254 = vld [vmem:[%s234] sm:$0xff]
      %v255 = vld [vmem:[%s234 + $0x8] sm:$0xff]
      %v256 = vld [vmem:[%s234 + $0x10] sm:$0xf]
      %260 = vrot.lane.b32.xlu0 %v254, 127
      %v261 = vpop.permute.xlu0 %260
      %262 = vrot.lane.b32.xlu0 %v255, 127
      %v263 = vpop.permute.xlu0 %262
      %264 = vrot.lane.b32.xlu0 %v256, 127
      %v265 = vpop.permute.xlu0 %264
      %v266 = vrot.slane %v261, 4
      %v267 = vrot.slane %v263, 4
      %v268 = vrot.slane %v265, 4
      %vm269 = vcmask 1043456
      %v270 = vsel %vm269, %v266, %v267
      %vm271 = vcmask 1039360
      %v272 = vsel %vm271, %v261, %v270
      %v273 = vsel %vm269, %v267, %v268
      %v274 = vsel %vm271, %v263, %v273
      %277 = vst [vmem:[#allocation3 + $0x10] sm:$0xff] %v272
      %278 = vst [vmem:[#allocation3 + $0x18] sm:$0xff] %v274
      %v279 = vld [vmem:[%s234] sm:$0xff]
      %v280 = vld [vmem:[%s234 + $0x8] sm:$0xff]
      %v281 = vld [vmem:[%s234 + $0x10] sm:$0xf]
      %285 = vrot.lane.b32.xlu0 %v279, 126
      %v286 = vpop.permute.xlu0 %285
      %287 = vrot.lane.b32.xlu0 %v280, 126
      %v288 = vpop.permute.xlu0 %287
      %289 = vrot.lane.b32.xlu0 %v281, 126
      %v290 = vpop.permute.xlu0 %289
      %v291 = vrot.slane %v286, 4
      %v292 = vrot.slane %v288, 4
      %v293 = vrot.slane %v290, 4
      %v294 = vsel %vm269, %v291, %v292
      %vm295 = vcmask 1031168
      %v296 = vsel %vm295, %v286, %v294
      %v297 = vsel %vm269, %v292, %v293
      %v298 = vsel %vm295, %v288, %v297
      %301 = vst [vmem:[#allocation3 + $0x20] sm:$0xff] %v296
      %302 = vst [vmem:[#allocation3 + $0x28] sm:$0xff] %v298
      %v303 = vld [vmem:[#allocation3] sm:$0xff]
      %v304 = vld [vmem:[#allocation3 + $0x8] sm:$0xf]
      %v305 = vld [vmem:[#allocation3 + $0x10] sm:$0xff]
      %v306 = vld [vmem:[#allocation3 + $0x18] sm:$0xf]
      %v307 = vld [vmem:[#allocation3 + $0x20] sm:$0xff]
      %v308 = vld [vmem:[#allocation3 + $0x28] sm:$0xf]
      %v309 = vld [vmem:[%s2] sm:$0xf]
      %v310 = vld [vmem:[#allocation3] sm:$0xff]
      %v311 = vld [vmem:[#allocation3 + $0x8] sm:$0xff]
      %v312 = vld [vmem:[#allocation3 + $0x10] sm:$0xff]
      %v313 = vld [vmem:[#allocation3 + $0x18] sm:$0xff]
      %v314 = vld [vmem:[#allocation3 + $0x20] sm:$0xff]
      %v315 = vld [vmem:[#allocation3 + $0x28] sm:$0xff]
      %s316 = scalar_lea.vmem %s2, 4
      %v317 = vld [vmem:[%s316] sm:$0xf]
      %v324 = vunpack.c.l.b16 %v310
      %v325 = vunpack.c.h.b16 %v310
      %v326 = vunpack.c.l.b16 %v311
      %v327 = vunpack.c.h.b16 %v311
      %v328 = vunpack.c.l.b16 %v312
      %v329 = vunpack.c.h.b16 %v312
      %v330 = vunpack.c.l.b16 %v313
      %v331 = vunpack.c.h.b16 %v313
      %v332 = vunpack.c.l.b16 %v314
      %v333 = vunpack.c.h.b16 %v314
      %v334 = vunpack.c.l.b16 %v315
      %v335 = vunpack.c.h.b16 %v315
      %v336 = vpack.c.b16 %v328, %v324
      %v337 = vpack.c.b16 %v329, %v325
      %v338 = vpack.c.b16 %v330, %v326
      %v339 = vpack.c.b16 %v331, %v327
      %v340 = vpack.c.b16 %v332, %v332
      %v341 = vpack.c.b16 %v333, %v333
      %v342 = vpack.c.b16 %v334, %v334
      %v343 = vpack.c.b16 %v335, %v335
      %344 = vrot.lane.b32.xlu0 %v336, 110
      %v345 = vpop.permute.xlu0 %344
      %346 = vrot.lane.b32.xlu0 %v337, 110
      %v347 = vpop.permute.xlu0 %346
      %348 = vrot.lane.b32.xlu0 %v338, 110
      %v349 = vpop.permute.xlu0 %348
      %350 = vrot.lane.b32.xlu0 %v339, 110
      %v351 = vpop.permute.xlu0 %350
      %352 = vrot.lane.b32.xlu0 %v340, 110
      %v353 = vpop.permute.xlu0 %352
      %354 = vrot.lane.b32.xlu0 %v341, 110
      %v355 = vpop.permute.xlu0 %354
      %356 = vrot.lane.b32.xlu0 %v342, 110
      %v357 = vpop.permute.xlu0 %356
      %358 = vrot.lane.b32.xlu0 %v343, 110
      %v359 = vpop.permute.xlu0 %358
      %vm360 = vcmask 900096
      %v361 = vsel %vm360, %v345, %v347
      %v362 = vsel %vm360, %v347, %v349
      %v363 = vsel %vm360, %v349, %v351
      %v364 = vsel %vm360, %v353, %v355
      %v365 = vsel %vm360, %v355, %v357
      %v366 = vsel %vm360, %v357, %v359
      %vm370 = vcmask 195584
      %v372 = vsel %vm370, %v317, 0
      %vm374 = vcmask 1043456
      %v376 = vsel %vm374, %v364, 0
      %v379 = vsel %vm374, %v365, 0
      %v382 = vsel %vm374, %v366, 0
      %384 = vmatprep.subr.bf16.mxu0 0
      %385 = vmatpush1.bf16.msra.mxu0 0
      %386 = vmatprep.subr.bf16.mxu0 0
      %387 = vmatpush1.bf16.msra.mxu0 0
      %388 = vmatprep.subr.bf16.mxu0 0
      %389 = vmatpush1.bf16.msra.mxu0 0
      %390 = vmatprep.subr.bf16.mxu0 0
      %391 = vmatpush1.bf16.msra.mxu0 0
      %392 = vmatprep.subr.bf16.mxu0 0
      %393 = vmatpush1.bf16.msra.mxu0 0
      %394 = vmatprep.subr.bf16.mxu0 0
      %395 = vmatpush1.bf16.msra.mxu0 0
      %396 = vmatprep.subr.bf16.mxu0 %v379
      %397 = vmatpush1.bf16.msra.mxu0 %v376
      %398 = vmatprep.subr.bf16.mxu0 %v362
      %399 = vmatpush1.bf16.msra.mxu0 %v361
      %400 = vmatprep.subr.bf16.mxu0 0
      %401 = vmatpush2.bf16.msra.mxu0 0
      %402 = vmatprep.subr.bf16.mxu0 0
      %403 = vmatpush2.bf16.msra.mxu0 0
      %404 = vmatprep.subr.bf16.mxu0 0
      %405 = vmatpush2.bf16.msra.mxu0 0
      %406 = vmatprep.subr.bf16.mxu0 0
      %407 = vmatpush2.bf16.msra.mxu0 0
      %408 = vmatprep.subr.bf16.mxu0 0
      %409 = vmatpush2.bf16.msra.mxu0 0
      %410 = vmatprep.subr.bf16.mxu0 0
      %411 = vmatpush2.bf16.msra.mxu0 0
      %412 = vmatprep.subr.bf16.mxu0 0
      %413 = vmatpush2.bf16.msra.mxu0 0
      %414 = vmatprep.subr.bf16.mxu0 0
      %415 = vmatpush2.bf16.msra.mxu0 0
      %416 = vmatprep.mubr.bf16.mxu0 0
      %417 = vmatmul.mubr.bf16.gmra.mxu0 %v372
      %v418 = vpop.f32.mrf.mxu0
      %v419 = vadd.f32 0.0, %v418
      %v420 = vpop.f32.mrf.mxu0
      %v421 = vadd.f32 0.0, %v420
      %v422 = vpop.f32.mrf.mxu0
      %v423 = vpop.f32.mrf.mxu0
      %424 = vdwg.mxu0
      %425 = vmatprep.subr.bf16.mxu0 0
      %426 = vmatpush1.bf16.msra.mxu0 0
      %427 = vmatprep.subr.bf16.mxu0 0
      %428 = vmatpush1.bf16.msra.mxu0 0
      %429 = vmatprep.subr.bf16.mxu0 0
      %430 = vmatpush1.bf16.msra.mxu0 0
      %431 = vmatprep.subr.bf16.mxu0 0
      %432 = vmatpush1.bf16.msra.mxu0 0
      %433 = vmatprep.subr.bf16.mxu0 0
      %434 = vmatpush1.bf16.msra.mxu0 0
      %435 = vmatprep.subr.bf16.mxu0 0
      %436 = vmatpush1.bf16.msra.mxu0 0
      %437 = vmatprep.subr.bf16.mxu0 0
      %438 = vmatpush1.bf16.msra.mxu0 %v382
      %439 = vmatprep.subr.bf16.mxu0 0
      %440 = vmatpush1.bf16.msra.mxu0 %v363
      %441 = vmatprep.subr.bf16.mxu0 0
      %442 = vmatpush2.bf16.msra.mxu0 0
      %443 = vmatprep.subr.bf16.mxu0 0
      %444 = vmatpush2.bf16.msra.mxu0 0
      %445 = vmatprep.subr.bf16.mxu0 0
      %446 = vmatpush2.bf16.msra.mxu0 0
      %447 = vmatprep.subr.bf16.mxu0 0
      %448 = vmatpush2.bf16.msra.mxu0 0
      %449 = vmatprep.subr.bf16.mxu0 0
      %450 = vmatpush2.bf16.msra.mxu0 0
      %451 = vmatprep.subr.bf16.mxu0 0
      %452 = vmatpush2.bf16.msra.mxu0 0
      %453 = vmatprep.subr.bf16.mxu0 0
      %454 = vmatpush2.bf16.msra.mxu0 0
      %455 = vmatprep.subr.bf16.mxu0 0
      %456 = vmatpush2.bf16.msra.mxu0 0
      %457 = vmatprep.mubr.bf16.mxu0 0
      %458 = vmatmul.mubr.bf16.gmra.mxu0 %v372
      %v459 = vpop.f32.mrf.mxu0
      %v460 = vadd.f32 0.0, %v459
      %v461 = vpop.f32.mrf.mxu0
      %v462 = vpop.f32.mrf.mxu0
      %v463 = vpop.f32.mrf.mxu0
      %464 = vdwg.mxu0
      %v471 = vunpack.c.l.b16 %v303
      %v472 = vunpack.c.h.b16 %v303
      %v473 = vunpack.c.l.b16 %v304
      %v474 = vunpack.c.l.b16 %v305
      %v475 = vunpack.c.h.b16 %v305
      %v476 = vunpack.c.l.b16 %v306
      %v477 = vunpack.c.l.b16 %v307
      %v478 = vunpack.c.h.b16 %v307
      %v479 = vunpack.c.l.b16 %v308
      %v480 = vpack.c.b16 %v474, %v471
      %v481 = vpack.c.b16 %v475, %v472
      %v482 = vpack.c.b16 %v476, %v473
      %v483 = vpack.c.b16 %v477, %v477
      %v484 = vpack.c.b16 %v478, %v478
      %v485 = vpack.c.b16 %v479, %v479
      %v490 = vsel %vm370, %v309, 0
      %v493 = vsel %vm374, %v483, 0
      %v496 = vsel %vm374, %v484, 0
      %v499 = vsel %vm374, %v485, 0
      %501 = vmatprep.subr.bf16.mxu0 0
      %502 = vmatpush1.bf16.msra.mxu0 0
      %503 = vmatprep.subr.bf16.mxu0 0
      %504 = vmatpush1.bf16.msra.mxu0 0
      %505 = vmatprep.subr.bf16.mxu0 0
      %506 = vmatpush1.bf16.msra.mxu0 0
      %507 = vmatprep.subr.bf16.mxu0 0
      %508 = vmatpush1.bf16.msra.mxu0 0
      %509 = vmatprep.subr.bf16.mxu0 0
      %510 = vmatpush1.bf16.msra.mxu0 0
      %511 = vmatprep.subr.bf16.mxu0 0
      %512 = vmatpush1.bf16.msra.mxu0 0
      %513 = vmatprep.subr.bf16.mxu0 %v496
      %514 = vmatpush1.bf16.msra.mxu0 %v493
      %515 = vmatprep.subr.bf16.mxu0 %v481
      %516 = vmatpush1.bf16.msra.mxu0 %v480
      %517 = vmatprep.subr.bf16.mxu0 0
      %518 = vmatpush2.bf16.msra.mxu0 0
      %519 = vmatprep.subr.bf16.mxu0 0
      %520 = vmatpush2.bf16.msra.mxu0 0
      %521 = vmatprep.subr.bf16.mxu0 0
      %522 = vmatpush2.bf16.msra.mxu0 0
      %523 = vmatprep.subr.bf16.mxu0 0
      %524 = vmatpush2.bf16.msra.mxu0 0
      %525 = vmatprep.subr.bf16.mxu0 0
      %526 = vmatpush2.bf16.msra.mxu0 0
      %527 = vmatprep.subr.bf16.mxu0 0
      %528 = vmatpush2.bf16.msra.mxu0 0
      %529 = vmatprep.subr.bf16.mxu0 0
      %530 = vmatpush2.bf16.msra.mxu0 0
      %531 = vmatprep.subr.bf16.mxu0 0
      %532 = vmatpush2.bf16.msra.mxu0 0
      %533 = vmatprep.mubr.bf16.mxu0 0
      %534 = vmatmul.mubr.bf16.gmra.mxu0 %v490
      %v535 = vpop.f32.mrf.mxu0
      %v536 = vadd.f32 %v419, %v535
      %v537 = vpop.f32.mrf.mxu0
      %v538 = vadd.f32 %v421, %v537
      %v539 = vpop.f32.mrf.mxu0
      %v540 = vpop.f32.mrf.mxu0
      %541 = vdwg.mxu0
      %542 = vmatprep.subr.bf16.mxu0 0
      %543 = vmatpush1.bf16.msra.mxu0 0
      %544 = vmatprep.subr.bf16.mxu0 0
      %545 = vmatpush1.bf16.msra.mxu0 0
      %546 = vmatprep.subr.bf16.mxu0 0
      %547 = vmatpush1.bf16.msra.mxu0 0
      %548 = vmatprep.subr.bf16.mxu0 0
      %549 = vmatpush1.bf16.msra.mxu0 0
      %550 = vmatprep.subr.bf16.mxu0 0
      %551 = vmatpush1.bf16.msra.mxu0 0
      %552 = vmatprep.subr.bf16.mxu0 0
      %553 = vmatpush1.bf16.msra.mxu0 0
      %554 = vmatprep.subr.bf16.mxu0 0
      %555 = vmatpush1.bf16.msra.mxu0 %v499
      %556 = vmatprep.subr.bf16.mxu0 0
      %557 = vmatpush1.bf16.msra.mxu0 %v482
      %558 = vmatprep.subr.bf16.mxu0 0
      %559 = vmatpush2.bf16.msra.mxu0 0
      %560 = vmatprep.subr.bf16.mxu0 0
      %561 = vmatpush2.bf16.msra.mxu0 0
      %562 = vmatprep.subr.bf16.mxu0 0
      %563 = vmatpush2.bf16.msra.mxu0 0
      %564 = vmatprep.subr.bf16.mxu0 0
      %565 = vmatpush2.bf16.msra.mxu0 0
      %566 = vmatprep.subr.bf16.mxu0 0
      %567 = vmatpush2.bf16.msra.mxu0 0
      %568 = vmatprep.subr.bf16.mxu0 0
      %569 = vmatpush2.bf16.msra.mxu0 0
      %570 = vmatprep.subr.bf16.mxu0 0
      %571 = vmatpush2.bf16.msra.mxu0 0
      %572 = vmatprep.subr.bf16.mxu0 0
      %573 = vmatpush2.bf16.msra.mxu0 0
      %574 = vmatprep.mubr.bf16.mxu0 0
      %575 = vmatmul.mubr.bf16.gmra.mxu0 %v490
      %v576 = vpop.f32.mrf.mxu0
      %v577 = vadd.f32 %v460, %v576
      %v578 = vpop.f32.mrf.mxu0
      %v579 = vpop.f32.mrf.mxu0
      %v580 = vpop.f32.mrf.mxu0
      %581 = vdwg.mxu0
      %s582 = scalar_lea.vmem %s2, 8
      %v583 = vld [vmem:[%s582] sm:$0xf]
      %584 = vrot.lane.b32.xlu0 %v336, 92
      %v585 = vpop.permute.xlu0 %584
      %586 = vrot.lane.b32.xlu0 %v337, 92
      %v587 = vpop.permute.xlu0 %586
      %588 = vrot.lane.b32.xlu0 %v338, 92
      %v589 = vpop.permute.xlu0 %588
      %590 = vrot.lane.b32.xlu0 %v339, 92
      %v591 = vpop.permute.xlu0 %590
      %592 = vrot.lane.b32.xlu0 %v340, 92
      %v593 = vpop.permute.xlu0 %592
      %594 = vrot.lane.b32.xlu0 %v341, 92
      %v595 = vpop.permute.xlu0 %594
      %596 = vrot.lane.b32.xlu0 %v342, 92
      %v597 = vpop.permute.xlu0 %596
      %598 = vrot.lane.b32.xlu0 %v343, 92
      %v599 = vpop.permute.xlu0 %598
      %vm600 = vcmask 752640
      %v601 = vsel %vm600, %v585, %v587
      %v602 = vsel %vm600, %v587, %v589
      %v603 = vsel %vm600, %v589, %v591
      %v604 = vsel %vm600, %v593, %v595
      %v605 = vsel %vm600, %v595, %v597
      %v606 = vsel %vm600, %v597, %v599
      %v611 = vsel %vm370, %v583, 0
      %v614 = vsel %vm374, %v604, 0
      %v617 = vsel %vm374, %v605, 0
      %v620 = vsel %vm374, %v606, 0
      %622 = vmatprep.subr.bf16.mxu0 0
      %623 = vmatpush1.bf16.msra.mxu0 0
      %624 = vmatprep.subr.bf16.mxu0 0
      %625 = vmatpush1.bf16.msra.mxu0 0
      %626 = vmatprep.subr.bf16.mxu0 0
      %627 = vmatpush1.bf16.msra.mxu0 0
      %628 = vmatprep.subr.bf16.mxu0 0
      %629 = vmatpush1.bf16.msra.mxu0 0
      %630 = vmatprep.subr.bf16.mxu0 0
      %631 = vmatpush1.bf16.msra.mxu0 0
      %632 = vmatprep.subr.bf16.mxu0 0
      %633 = vmatpush1.bf16.msra.mxu0 0
      %634 = vmatprep.subr.bf16.mxu0 %v617
      %635 = vmatpush1.bf16.msra.mxu0 %v614
      %636 = vmatprep.subr.bf16.mxu0 %v602
      %637 = vmatpush1.bf16.msra.mxu0 %v601
      %638 = vmatprep.subr.bf16.mxu0 0
      %639 = vmatpush2.bf16.msra.mxu0 0
      %640 = vmatprep.subr.bf16.mxu0 0
      %641 = vmatpush2.bf16.msra.mxu0 0
      %642 = vmatprep.subr.bf16.mxu0 0
      %643 = vmatpush2.bf16.msra.mxu0 0
      %644 = vmatprep.subr.bf16.mxu0 0
      %645 = vmatpush2.bf16.msra.mxu0 0
      %646 = vmatprep.subr.bf16.mxu0 0
      %647 = vmatpush2.bf16.msra.mxu0 0
      %648 = vmatprep.subr.bf16.mxu0 0
      %649 = vmatpush2.bf16.msra.mxu0 0
      %650 = vmatprep.subr.bf16.mxu0 0
      %651 = vmatpush2.bf16.msra.mxu0 0
      %652 = vmatprep.subr.bf16.mxu0 0
      %653 = vmatpush2.bf16.msra.mxu0 0
      %654 = vmatprep.mubr.bf16.mxu0 0
      %655 = vmatmul.mubr.bf16.gmra.mxu0 %v611
      %v656 = vpop.f32.mrf.mxu0
      %v657 = vadd.f32 0.0, %v656
      %v658 = vpop.f32.mrf.mxu0
      %v659 = vadd.f32 0.0, %v658
      %v660 = vpop.f32.mrf.mxu0
      %v661 = vpop.f32.mrf.mxu0
      %662 = vdwg.mxu0
      %663 = vmatprep.subr.bf16.mxu0 0
      %664 = vmatpush1.bf16.msra.mxu0 0
      %665 = vmatprep.subr.bf16.mxu0 0
      %666 = vmatpush1.bf16.msra.mxu0 0
      %667 = vmatprep.subr.bf16.mxu0 0
      %668 = vmatpush1.bf16.msra.mxu0 0
      %669 = vmatprep.subr.bf16.mxu0 0
      %670 = vmatpush1.bf16.msra.mxu0 0
      %671 = vmatprep.subr.bf16.mxu0 0
      %672 = vmatpush1.bf16.msra.mxu0 0
      %673 = vmatprep.subr.bf16.mxu0 0
      %674 = vmatpush1.bf16.msra.mxu0 0
      %675 = vmatprep.subr.bf16.mxu0 0
      %676 = vmatpush1.bf16.msra.mxu0 %v620
      %677 = vmatprep.subr.bf16.mxu0 0
      %678 = vmatpush1.bf16.msra.mxu0 %v603
      %679 = vmatprep.subr.bf16.mxu0 0
      %680 = vmatpush2.bf16.msra.mxu0 0
      %681 = vmatprep.subr.bf16.mxu0 0
      %682 = vmatpush2.bf16.msra.mxu0 0
      %683 = vmatprep.subr.bf16.mxu0 0
      %684 = vmatpush2.bf16.msra.mxu0 0
      %685 = vmatprep.subr.bf16.mxu0 0
      %686 = vmatpush2.bf16.msra.mxu0 0
      %687 = vmatprep.subr.bf16.mxu0 0
      %688 = vmatpush2.bf16.msra.mxu0 0
      %689 = vmatprep.subr.bf16.mxu0 0
      %690 = vmatpush2.bf16.msra.mxu0 0
      %691 = vmatprep.subr.bf16.mxu0 0
      %692 = vmatpush2.bf16.msra.mxu0 0
      %693 = vmatprep.subr.bf16.mxu0 0
      %694 = vmatpush2.bf16.msra.mxu0 0
      %695 = vmatprep.mubr.bf16.mxu0 0
      %696 = vmatmul.mubr.bf16.gmra.mxu0 %v611
      %v697 = vpop.f32.mrf.mxu0
      %v698 = vadd.f32 0.0, %v697
      %v699 = vpop.f32.mrf.mxu0
      %v700 = vpop.f32.mrf.mxu0
      %v701 = vpop.f32.mrf.mxu0
      %702 = vdwg.mxu0
      %v703 = vadd.f32 %v536, %v657
      %v704 = vadd.f32 %v538, %v659
      %v705 = vadd.f32 %v577, %v698
      %v706 = vsel %vm247, 1, 0
      %v707 = vlaneseq
      %v708 = vshrl.u32 %v707, 7
      %v709 = vsub.s32 0, %v708
      %v710 = vrot.slane %v706, %v709
      %v711 = vlaneseq
      %v712 = vshrl.u32 %v711, 7
      %v713 = vsub.s32 1, %v712
      %v714 = vrot.slane %v706, %v713
      %v715 = vlaneseq
      %v716 = vshrl.u32 %v715, 7
      %v717 = vsub.s32 2, %v716
      %v718 = vrot.slane %v706, %v717
      %vm719 = vcmp.eq.s32.totalorder %v710, 1
      %vm720 = vcmp.eq.s32.totalorder %v714, 1
      %vm721 = vcmp.eq.s32.totalorder %v718, 1
      %v722 = vsel %vm719, %v703, 0.0
      %v723 = vsel %vm720, %v704, 0.0
      %v724 = vsel %vm721, %v705, 0.0
      %v725 = vadd.f32 %v722, %v723
      %v726 = vadd.f32 %v725, %v724
      %727 = vadd.xlane.f32.xlu0 %v726
      %v728 = vpop.xlane.xlu0 %727
      %v729 = vmul.f32 %v722, %v722
      %v730 = vmul.f32 %v723, %v723
      %v731 = vmul.f32 %v724, %v724
      %v732 = vadd.f32 %v729, %v730
      %v733 = vadd.f32 %v732, %v731
      %734 = vadd.xlane.f32.xlu0 %v733
      %v735 = vpop.xlane.xlu0 %734
      %v736 = vmul.f32 %v728, 0.00390625
      %v737 = vmul.f32 %v735, 0.00390625
      %v738 = vmul.f32 %v736, %v736
      %v739 = vsub.f32 %v737, %v738
      %v740 = vsub.f32 %v703, %v736
      %v741 = vsub.f32 %v704, %v736
      %v742 = vsub.f32 %v705, %v736
      %v743 = vadd.f32 %v739, 1e-05
      %v744 = vrsqrt.pop %v743
      %v745 = vmul.f32 %v740, %v744
      %v746 = vmul.f32 %v741, %v744
      %v747 = vmul.f32 %v742, %v744
      %v748 = vmax.f32 %v745, 0.0
      %v749 = vmax.f32 %v746, 0.0
      %v750 = vmax.f32 %v747, 0.0
      %751 = vrot.lane.b32.xlu0 %v748, 1
      %v752 = vpop.permute.xlu0 %751
      %753 = vrot.lane.b32.xlu0 %v749, 1
      %v754 = vpop.permute.xlu0 %753
      %755 = vrot.lane.b32.xlu0 %v750, 1
      %v756 = vpop.permute.xlu0 %755
      %v757 = vlaneseq
      %v758 = vand.u32 %v757, 127
      %vm759 = vcmp.lt.s32.totalorder %v758, 1
      %v760 = vsel %vm759, %v754, %v756
      %v761 = vsel %vm759, %v752, %v754
      %v762 = vsel %vm759, %v756, %v752
      %763 = vrot.lane.b32.xlu0 %v748, 127
      %v764 = vpop.permute.xlu0 %763
      %765 = vrot.lane.b32.xlu0 %v749, 127
      %v766 = vpop.permute.xlu0 %765
      %767 = vrot.lane.b32.xlu0 %v750, 127
      %v768 = vpop.permute.xlu0 %767
      %vm769 = vcmp.lt.s32.totalorder %v758, 127
      %v770 = vsel %vm769, %v766, %v768
      %v771 = vsel %vm769, %v764, %v766
      %v772 = vsel %vm769, %v768, %v764
      %773 = vrot.lane.b32.xlu0 %v748, 3
      %v774 = vpop.permute.xlu0 %773
      %775 = vrot.lane.b32.xlu0 %v749, 3
      %v776 = vpop.permute.xlu0 %775
      %777 = vrot.lane.b32.xlu0 %v750, 3
      %v778 = vpop.permute.xlu0 %777
      %vm779 = vcmp.lt.s32.totalorder %v758, 3
      %v780 = vsel %vm779, %v776, %v778
      %v781 = vsel %vm779, %v774, %v776
      %v782 = vsel %vm779, %v778, %v774
      %v783 = vsel %vm249, 1, 0
      %v784 = vlaneseq
      %v785 = vshrl.u32 %v784, 7
      %v786 = vsub.s32 0, %v785
      %v787 = vrot.slane %v783, %v786
      %v788 = vlaneseq
      %v789 = vshrl.u32 %v788, 7
      %v790 = vsub.s32 1, %v789
      %v791 = vrot.slane %v783, %v790
      %v792 = vlaneseq
      %v793 = vshrl.u32 %v792, 7
      %v794 = vsub.s32 2, %v793
      %v795 = vrot.slane %v783, %v794
      %vm796 = vcmp.eq.s32.totalorder %v787, 1
      %vm797 = vcmp.eq.s32.totalorder %v791, 1
      %vm798 = vcmp.eq.s32.totalorder %v795, 1
      %v799 = vsel %vm796, %v782, %v762
      %v800 = vsel %vm797, %v781, %v761
      %v801 = vsel %vm798, %v780, %v760
      %v802 = vsel %vm248, 1, 0
      %v803 = vlaneseq
      %v804 = vshrl.u32 %v803, 7
      %v805 = vsub.s32 0, %v804
      %v806 = vrot.slane %v802, %v805
      %v807 = vlaneseq
      %v808 = vshrl.u32 %v807, 7
      %v809 = vsub.s32 1, %v808
      %v810 = vrot.slane %v802, %v809
      %v811 = vlaneseq
      %v812 = vshrl.u32 %v811, 7
      %v813 = vsub.s32 2, %v812
      %v814 = vrot.slane %v802, %v813
      %vm815 = vcmp.eq.s32.totalorder %v806, 1
      %vm816 = vcmp.eq.s32.totalorder %v810, 1
      %vm817 = vcmp.eq.s32.totalorder %v814, 1
      %v818 = vsel %vm815, %v771, %v799
      %v819 = vsel %vm816, %v770, %v800
      %v820 = vsel %vm817, %v772, %v801
      %v821 = vpack.c.bf16 %v818, %v818
      %v822 = vpack.c.bf16 %v819, %v819
      %v823 = vpack.c.bf16 %v820, %v820
      %v827 = vunpack.c.l.b16 %v821
      %v828 = vunpack.c.l.b16 %v822
      %v829 = vunpack.c.l.b16 %v823
      %v830 = vpack.c.b16 %v828, %v827
      %v831 = vpack.c.b16 %v829, %v829
      %832 = vrot.lane.b32.xlu0 %v830, 18
      %v833 = vpop.permute.xlu0 %832
      %834 = vrot.lane.b32.xlu0 %v831, 18
      %v835 = vpop.permute.xlu0 %834
      %v836 = vrot.slane %v833, 4
      %v837 = vrot.slane %v835, 4
      %vm838 = vcmask 146432
      %v839 = vsel %vm838, %v836, %v833
      %v840 = vsel %vm269, %v836, %v837
      %v841 = vsel %vm838, %v840, %v835
      %vm844 = vcmask 1043600
      %vm845 = vcmask 1047556
      %vm846 = vmor %vm845, %vm844
      %847 = vst.msk [vmem:[#allocation2] sm:$0xff] %vm846, %v839
      %vm848 = vcmask 146436
      %vm849 = vmor %vm848, %vm374
      %850 = vst.msk [vmem:[#allocation2 + $0x8] sm:$0xff] %vm849, %v841
      %vm851 = vcmask 1044000
      %vm852 = vmor %vm845, %vm851
      %853 = vst.msk [vmem:[#allocation2 + $0x8] sm:$0xff] %vm852, 0
      %854 = vst [vmem:[#allocation2 + $0x10] sm:$0xf] 0
      %v855 = vld [vmem:[#allocation2] sm:$0xf]
      %857 = vrot.lane.b32.xlu0 %v855, 92
      %v858 = vpop.permute.xlu0 %857
      %vm860 = vcmask 142336
      %861 = vst.msk [vmem:[#allocation2] sm:$0xf] %vm860, %v858
      %v862 = vld [vmem:[#allocation2 + $0x8] sm:$0xf]
      %864 = vrot.lane.b32.xlu0 %v862, 36
      %v865 = vpop.permute.xlu0 %864
      %vm867 = vcmask 552336
      %868 = vst.msk [vmem:[#allocation2 + $0x8] sm:$0xf] %vm867, %v865
      %v869 = vld [vmem:[#allocation2] sm:$0xff]
      %v870 = vld [vmem:[#allocation2 + $0x8] sm:$0xff]
      %871 = vst [vmem:[#allocation3] sm:$0xff] %v869
      %872 = vst [vmem:[#allocation3 + $0x8] sm:$0xff] %v870
      %v873 = vld [vmem:[#allocation2] sm:$0xff]
      %v874 = vld [vmem:[#allocation2 + $0x8] sm:$0xff]
      %v875 = vld [vmem:[#allocation2 + $0x10] sm:$0xf]
      %879 = vrot.lane.b32.xlu0 %v873, 127
      %v880 = vpop.permute.xlu0 %879
      %881 = vrot.lane.b32.xlu0 %v874, 127
      %v882 = vpop.permute.xlu0 %881
      %883 = vrot.lane.b32.xlu0 %v875, 127
      %v884 = vpop.permute.xlu0 %883
      %v885 = vrot.slane %v880, 4
      %v886 = vrot.slane %v882, 4
      %v887 = vrot.slane %v884, 4
      %v888 = vsel %vm269, %v885, %v886
      %v889 = vsel %vm271, %v880, %v888
      %v890 = vsel %vm269, %v886, %v887
      %v891 = vsel %vm271, %v882, %v890
      %894 = vst [vmem:[#allocation3 + $0x10] sm:$0xff] %v889
      %895 = vst [vmem:[#allocation3 + $0x18] sm:$0xff] %v891
      %v896 = vld [vmem:[#allocation2] sm:$0xff]
      %v897 = vld [vmem:[#allocation2 + $0x8] sm:$0xff]
      %v898 = vld [vmem:[#allocation2 + $0x10] sm:$0xf]
      %902 = vrot.lane.b32.xlu0 %v896, 126
      %v903 = vpop.permute.xlu0 %902
      %904 = vrot.lane.b32.xlu0 %v897, 126
      %v905 = vpop.permute.xlu0 %904
      %906 = vrot.lane.b32.xlu0 %v898, 126
      %v907 = vpop.permute.xlu0 %906
      %v908 = vrot.slane %v903, 4
      %v909 = vrot.slane %v905, 4
      %v910 = vrot.slane %v907, 4
      %v911 = vsel %vm269, %v908, %v909
      %v912 = vsel %vm295, %v903, %v911
      %v913 = vsel %vm269, %v909, %v910
      %v914 = vsel %vm295, %v905, %v913
      %917 = vst [vmem:[#allocation3 + $0x20] sm:$0xff] %v912
      %918 = vst [vmem:[#allocation3 + $0x28] sm:$0xff] %v914
      %v919 = vld [vmem:[#allocation3] sm:$0xff]
      %v920 = vld [vmem:[#allocation3 + $0x8] sm:$0xf]
      %v921 = vld [vmem:[#allocation3 + $0x10] sm:$0xff]
      %v922 = vld [vmem:[#allocation3 + $0x18] sm:$0xf]
      %v923 = vld [vmem:[#allocation3 + $0x20] sm:$0xff]
      %v924 = vld [vmem:[#allocation3 + $0x28] sm:$0xf]
      %v925 = vld [vmem:[%s3] sm:$0xf]
      %v926 = vld [vmem:[#allocation3] sm:$0xff]
      %v927 = vld [vmem:[#allocation3 + $0x8] sm:$0xff]
      %v928 = vld [vmem:[#allocation3 + $0x10] sm:$0xff]
      %v929 = vld [vmem:[#allocation3 + $0x18] sm:$0xff]
      %v930 = vld [vmem:[#allocation3 + $0x20] sm:$0xff]
      %v931 = vld [vmem:[#allocation3 + $0x28] sm:$0xff]
      %s932 = scalar_lea.vmem %s3, 4
      %v933 = vld [vmem:[%s932] sm:$0xf]
      %v940 = vunpack.c.l.b16 %v926
      %v941 = vunpack.c.h.b16 %v926
      %v942 = vunpack.c.l.b16 %v927
      %v943 = vunpack.c.h.b16 %v927
      %v944 = vunpack.c.l.b16 %v928
      %v945 = vunpack.c.h.b16 %v928
      %v946 = vunpack.c.l.b16 %v929
      %v947 = vunpack.c.h.b16 %v929
      %v948 = vunpack.c.l.b16 %v930
      %v949 = vunpack.c.h.b16 %v930
      %v950 = vunpack.c.l.b16 %v931
      %v951 = vunpack.c.h.b16 %v931
      %v952 = vpack.c.b16 %v944, %v940
      %v953 = vpack.c.b16 %v945, %v941
      %v954 = vpack.c.b16 %v946, %v942
      %v955 = vpack.c.b16 %v947, %v943
      %v956 = vpack.c.b16 %v948, %v948
      %v957 = vpack.c.b16 %v949, %v949
      %v958 = vpack.c.b16 %v950, %v950
      %v959 = vpack.c.b16 %v951, %v951
      %960 = vrot.lane.b32.xlu0 %v952, 110
      %v961 = vpop.permute.xlu0 %960
      %962 = vrot.lane.b32.xlu0 %v953, 110
      %v963 = vpop.permute.xlu0 %962
      %964 = vrot.lane.b32.xlu0 %v954, 110
      %v965 = vpop.permute.xlu0 %964
      %966 = vrot.lane.b32.xlu0 %v955, 110
      %v967 = vpop.permute.xlu0 %966
      %968 = vrot.lane.b32.xlu0 %v956, 110
      %v969 = vpop.permute.xlu0 %968
      %970 = vrot.lane.b32.xlu0 %v957, 110
      %v971 = vpop.permute.xlu0 %970
      %972 = vrot.lane.b32.xlu0 %v958, 110
      %v973 = vpop.permute.xlu0 %972
      %974 = vrot.lane.b32.xlu0 %v959, 110
      %v975 = vpop.permute.xlu0 %974
      %v976 = vsel %vm360, %v961, %v963
      %v977 = vsel %vm360, %v963, %v965
      %v978 = vsel %vm360, %v965, %v967
      %v979 = vsel %vm360, %v969, %v971
      %v980 = vsel %vm360, %v971, %v973
      %v981 = vsel %vm360, %v973, %v975
      %v986 = vsel %vm370, %v933, 0
      %v989 = vsel %vm374, %v979, 0
      %v992 = vsel %vm374, %v980, 0
      %v995 = vsel %vm374, %v981, 0
      %997 = vmatprep.subr.bf16.mxu0 0
      %998 = vmatpush1.bf16.msra.mxu0 0
      %999 = vmatprep.subr.bf16.mxu0 0
      %1000 = vmatpush1.bf16.msra.mxu0 0
      %1001 = vmatprep.subr.bf16.mxu0 0
      %1002 = vmatpush1.bf16.msra.mxu0 0
      %1003 = vmatprep.subr.bf16.mxu0 0
      %1004 = vmatpush1.bf16.msra.mxu0 0
      %1005 = vmatprep.subr.bf16.mxu0 0
      %1006 = vmatpush1.bf16.msra.mxu0 0
      %1007 = vmatprep.subr.bf16.mxu0 0
      %1008 = vmatpush1.bf16.msra.mxu0 0
      %1009 = vmatprep.subr.bf16.mxu0 %v992
      %1010 = vmatpush1.bf16.msra.mxu0 %v989
      %1011 = vmatprep.subr.bf16.mxu0 %v977
      %1012 = vmatpush1.bf16.msra.mxu0 %v976
      %1013 = vmatprep.subr.bf16.mxu0 0
      %1014 = vmatpush2.bf16.msra.mxu0 0
      %1015 = vmatprep.subr.bf16.mxu0 0
      %1016 = vmatpush2.bf16.msra.mxu0 0
      %1017 = vmatprep.subr.bf16.mxu0 0
      %1018 = vmatpush2.bf16.msra.mxu0 0
      %1019 = vmatprep.subr.bf16.mxu0 0
      %1020 = vmatpush2.bf16.msra.mxu0 0
      %1021 = vmatprep.subr.bf16.mxu0 0
      %1022 = vmatpush2.bf16.msra.mxu0 0
      %1023 = vmatprep.subr.bf16.mxu0 0
      %1024 = vmatpush2.bf16.msra.mxu0 0
      %1025 = vmatprep.subr.bf16.mxu0 0
      %1026 = vmatpush2.bf16.msra.mxu0 0
      %1027 = vmatprep.subr.bf16.mxu0 0
      %1028 = vmatpush2.bf16.msra.mxu0 0
      %1029 = vmatprep.mubr.bf16.mxu0 0
      %1030 = vmatmul.mubr.bf16.gmra.mxu0 %v986
      %v1031 = vpop.f32.mrf.mxu0
      %v1032 = vadd.f32 0.0, %v1031
      %v1033 = vpop.f32.mrf.mxu0
      %v1034 = vadd.f32 0.0, %v1033
      %v1035 = vpop.f32.mrf.mxu0
      %v1036 = vpop.f32.mrf.mxu0
      %1037 = vdwg.mxu0
      %1038 = vmatprep.subr.bf16.mxu0 0
      %1039 = vmatpush1.bf16.msra.mxu0 0
      %1040 = vmatprep.subr.bf16.mxu0 0
      %1041 = vmatpush1.bf16.msra.mxu0 0
      %1042 = vmatprep.subr.bf16.mxu0 0
      %1043 = vmatpush1.bf16.msra.mxu0 0
      %1044 = vmatprep.subr.bf16.mxu0 0
      %1045 = vmatpush1.bf16.msra.mxu0 0
      %1046 = vmatprep.subr.bf16.mxu0 0
      %1047 = vmatpush1.bf16.msra.mxu0 0
      %1048 = vmatprep.subr.bf16.mxu0 0
      %1049 = vmatpush1.bf16.msra.mxu0 0
      %1050 = vmatprep.subr.bf16.mxu0 0
      %1051 = vmatpush1.bf16.msra.mxu0 %v995
      %1052 = vmatprep.subr.bf16.mxu0 0
      %1053 = vmatpush1.bf16.msra.mxu0 %v978
      %1054 = vmatprep.subr.bf16.mxu0 0
      %1055 = vmatpush2.bf16.msra.mxu0 0
      %1056 = vmatprep.subr.bf16.mxu0 0
      %1057 = vmatpush2.bf16.msra.mxu0 0
      %1058 = vmatprep.subr.bf16.mxu0 0
      %1059 = vmatpush2.bf16.msra.mxu0 0
      %1060 = vmatprep.subr.bf16.mxu0 0
      %1061 = vmatpush2.bf16.msra.mxu0 0
      %1062 = vmatprep.subr.bf16.mxu0 0
      %1063 = vmatpush2.bf16.msra.mxu0 0
      %1064 = vmatprep.subr.bf16.mxu0 0
      %1065 = vmatpush2.bf16.msra.mxu0 0
      %1066 = vmatprep.subr.bf16.mxu0 0
      %1067 = vmatpush2.bf16.msra.mxu0 0
      %1068 = vmatprep.subr.bf16.mxu0 0
      %1069 = vmatpush2.bf16.msra.mxu0 0
      %1070 = vmatprep.mubr.bf16.mxu0 0
      %1071 = vmatmul.mubr.bf16.gmra.mxu0 %v986
      %v1072 = vpop.f32.mrf.mxu0
      %v1073 = vadd.f32 0.0, %v1072
      %v1074 = vpop.f32.mrf.mxu0
      %v1075 = vpop.f32.mrf.mxu0
      %v1076 = vpop.f32.mrf.mxu0
      %1077 = vdwg.mxu0
      %v1084 = vunpack.c.l.b16 %v919
      %v1085 = vunpack.c.h.b16 %v919
      %v1086 = vunpack.c.l.b16 %v920
      %v1087 = vunpack.c.l.b16 %v921
      %v1088 = vunpack.c.h.b16 %v921
      %v1089 = vunpack.c.l.b16 %v922
      %v1090 = vunpack.c.l.b16 %v923
      %v1091 = vunpack.c.h.b16 %v923
      %v1092 = vunpack.c.l.b16 %v924
      %v1093 = vpack.c.b16 %v1087, %v1084
      %v1094 = vpack.c.b16 %v1088, %v1085
      %v1095 = vpack.c.b16 %v1089, %v1086
      %v1096 = vpack.c.b16 %v1090, %v1090
      %v1097 = vpack.c.b16 %v1091, %v1091
      %v1098 = vpack.c.b16 %v1092, %v1092
      %v1103 = vsel %vm370, %v925, 0
      %v1106 = vsel %vm374, %v1096, 0
      %v1109 = vsel %vm374, %v1097, 0
      %v1112 = vsel %vm374, %v1098, 0
      %1114 = vmatprep.subr.bf16.mxu0 0
      %1115 = vmatpush1.bf16.msra.mxu0 0
      %1116 = vmatprep.subr.bf16.mxu0 0
      %1117 = vmatpush1.bf16.msra.mxu0 0
      %1118 = vmatprep.subr.bf16.mxu0 0
      %1119 = vmatpush1.bf16.msra.mxu0 0
      %1120 = vmatprep.subr.bf16.mxu0 0
      %1121 = vmatpush1.bf16.msra.mxu0 0
      %1122 = vmatprep.subr.bf16.mxu0 0
      %1123 = vmatpush1.bf16.msra.mxu0 0
      %1124 = vmatprep.subr.bf16.mxu0 0
      %1125 = vmatpush1.bf16.msra.mxu0 0
      %1126 = vmatprep.subr.bf16.mxu0 %v1109
      %1127 = vmatpush1.bf16.msra.mxu0 %v1106
      %1128 = vmatprep.subr.bf16.mxu0 %v1094
      %1129 = vmatpush1.bf16.msra.mxu0 %v1093
      %1130 = vmatprep.subr.bf16.mxu0 0
      %1131 = vmatpush2.bf16.msra.mxu0 0
      %1132 = vmatprep.subr.bf16.mxu0 0
      %1133 = vmatpush2.bf16.msra.mxu0 0
      %1134 = vmatprep.subr.bf16.mxu0 0
      %1135 = vmatpush2.bf16.msra.mxu0 0
      %1136 = vmatprep.subr.bf16.mxu0 0
      %1137 = vmatpush2.bf16.msra.mxu0 0
      %1138 = vmatprep.subr.bf16.mxu0 0
      %1139 = vmatpush2.bf16.msra.mxu0 0
      %1140 = vmatprep.subr.bf16.mxu0 0
      %1141 = vmatpush2.bf16.msra.mxu0 0
      %1142 = vmatprep.subr.bf16.mxu0 0
      %1143 = vmatpush2.bf16.msra.mxu0 0
      %1144 = vmatprep.subr.bf16.mxu0 0
      %1145 = vmatpush2.bf16.msra.mxu0 0
      %1146 = vmatprep.mubr.bf16.mxu0 0
      %1147 = vmatmul.mubr.bf16.gmra.mxu0 %v1103
      %v1148 = vpop.f32.mrf.mxu0
      %v1149 = vadd.f32 %v1032, %v1148
      %v1150 = vpop.f32.mrf.mxu0
      %v1151 = vadd.f32 %v1034, %v1150
      %v1152 = vpop.f32.mrf.mxu0
      %v1153 = vpop.f32.mrf.mxu0
      %1154 = vdwg.mxu0
      %1155 = vmatprep.subr.bf16.mxu0 0
      %1156 = vmatpush1.bf16.msra.mxu0 0
      %1157 = vmatprep.subr.bf16.mxu0 0
      %1158 = vmatpush1.bf16.msra.mxu0 0
      %1159 = vmatprep.subr.bf16.mxu0 0
      %1160 = vmatpush1.bf16.msra.mxu0 0
      %1161 = vmatprep.subr.bf16.mxu0 0
      %1162 = vmatpush1.bf16.msra.mxu0 0
      %1163 = vmatprep.subr.bf16.mxu0 0
      %1164 = vmatpush1.bf16.msra.mxu0 0
      %1165 = vmatprep.subr.bf16.mxu0 0
      %1166 = vmatpush1.bf16.msra.mxu0 0
      %1167 = vmatprep.subr.bf16.mxu0 0
      %1168 = vmatpush1.bf16.msra.mxu0 %v1112
      %1169 = vmatprep.subr.bf16.mxu0 0
      %1170 = vmatpush1.bf16.msra.mxu0 %v1095
      %1171 = vmatprep.subr.bf16.mxu0 0
      %1172 = vmatpush2.bf16.msra.mxu0 0
      %1173 = vmatprep.subr.bf16.mxu0 0
      %1174 = vmatpush2.bf16.msra.mxu0 0
      %1175 = vmatprep.subr.bf16.mxu0 0
      %1176 = vmatpush2.bf16.msra.mxu0 0
      %1177 = vmatprep.subr.bf16.mxu0 0
      %1178 = vmatpush2.bf16.msra.mxu0 0
      %1179 = vmatprep.subr.bf16.mxu0 0
      %1180 = vmatpush2.bf16.msra.mxu0 0
      %1181 = vmatprep.subr.bf16.mxu0 0
      %1182 = vmatpush2.bf16.msra.mxu0 0
      %1183 = vmatprep.subr.bf16.mxu0 0
      %1184 = vmatpush2.bf16.msra.mxu0 0
      %1185 = vmatprep.subr.bf16.mxu0 0
      %1186 = vmatpush2.bf16.msra.mxu0 0
      %1187 = vmatprep.mubr.bf16.mxu0 0
      %1188 = vmatmul.mubr.bf16.gmra.mxu0 %v1103
      %v1189 = vpop.f32.mrf.mxu0
      %v1190 = vadd.f32 %v1073, %v1189
      %v1191 = vpop.f32.mrf.mxu0
      %v1192 = vpop.f32.mrf.mxu0
      %v1193 = vpop.f32.mrf.mxu0
      %1194 = vdwg.mxu0
      %s1195 = scalar_lea.vmem %s3, 8
      %v1196 = vld [vmem:[%s1195] sm:$0xf]
      %1197 = vrot.lane.b32.xlu0 %v952, 92
      %v1198 = vpop.permute.xlu0 %1197
      %1199 = vrot.lane.b32.xlu0 %v953, 92
      %v1200 = vpop.permute.xlu0 %1199
      %1201 = vrot.lane.b32.xlu0 %v954, 92
      %v1202 = vpop.permute.xlu0 %1201
      %1203 = vrot.lane.b32.xlu0 %v955, 92
      %v1204 = vpop.permute.xlu0 %1203
      %1205 = vrot.lane.b32.xlu0 %v956, 92
      %v1206 = vpop.permute.xlu0 %1205
      %1207 = vrot.lane.b32.xlu0 %v957, 92
      %v1208 = vpop.permute.xlu0 %1207
      %1209 = vrot.lane.b32.xlu0 %v958, 92
      %v1210 = vpop.permute.xlu0 %1209
      %1211 = vrot.lane.b32.xlu0 %v959, 92
      %v1212 = vpop.permute.xlu0 %1211
      %v1213 = vsel %vm600, %v1198, %v1200
      %v1214 = vsel %vm600, %v1200, %v1202
      %v1215 = vsel %vm600, %v1202, %v1204
      %v1216 = vsel %vm600, %v1206, %v1208
      %v1217 = vsel %vm600, %v1208, %v1210
      %v1218 = vsel %vm600, %v1210, %v1212
      %v1223 = vsel %vm370, %v1196, 0
      %v1226 = vsel %vm374, %v1216, 0
      %v1229 = vsel %vm374, %v1217, 0
      %v1232 = vsel %vm374, %v1218, 0
      %1234 = vmatprep.subr.bf16.mxu0 0
      %1235 = vmatpush1.bf16.msra.mxu0 0
      %1236 = vmatprep.subr.bf16.mxu0 0
      %1237 = vmatpush1.bf16.msra.mxu0 0
      %1238 = vmatprep.subr.bf16.mxu0 0
      %1239 = vmatpush1.bf16.msra.mxu0 0
      %1240 = vmatprep.subr.bf16.mxu0 0
      %1241 = vmatpush1.bf16.msra.mxu0 0
      %1242 = vmatprep.subr.bf16.mxu0 0
      %1243 = vmatpush1.bf16.msra.mxu0 0
      %1244 = vmatprep.subr.bf16.mxu0 0
      %1245 = vmatpush1.bf16.msra.mxu0 0
      %1246 = vmatprep.subr.bf16.mxu0 %v1229
      %1247 = vmatpush1.bf16.msra.mxu0 %v1226
      %1248 = vmatprep.subr.bf16.mxu0 %v1214
      %1249 = vmatpush1.bf16.msra.mxu0 %v1213
      %1250 = vmatprep.subr.bf16.mxu0 0
      %1251 = vmatpush2.bf16.msra.mxu0 0
      %1252 = vmatprep.subr.bf16.mxu0 0
      %1253 = vmatpush2.bf16.msra.mxu0 0
      %1254 = vmatprep.subr.bf16.mxu0 0
      %1255 = vmatpush2.bf16.msra.mxu0 0
      %1256 = vmatprep.subr.bf16.mxu0 0
      %1257 = vmatpush2.bf16.msra.mxu0 0
      %1258 = vmatprep.subr.bf16.mxu0 0
      %1259 = vmatpush2.bf16.msra.mxu0 0
      %1260 = vmatprep.subr.bf16.mxu0 0
      %1261 = vmatpush2.bf16.msra.mxu0 0
      %1262 = vmatprep.subr.bf16.mxu0 0
      %1263 = vmatpush2.bf16.msra.mxu0 0
      %1264 = vmatprep.subr.bf16.mxu0 0
      %1265 = vmatpush2.bf16.msra.mxu0 0
      %1266 = vmatprep.mubr.bf16.mxu0 0
      %1267 = vmatmul.mubr.bf16.gmra.mxu0 %v1223
      %v1268 = vpop.f32.mrf.mxu0
      %v1269 = vadd.f32 0.0, %v1268
      %v1270 = vpop.f32.mrf.mxu0
      %v1271 = vadd.f32 0.0, %v1270
      %v1272 = vpop.f32.mrf.mxu0
      %v1273 = vpop.f32.mrf.mxu0
      %1274 = vdwg.mxu0
      %1275 = vmatprep.subr.bf16.mxu0 0
      %1276 = vmatpush1.bf16.msra.mxu0 0
      %1277 = vmatprep.subr.bf16.mxu0 0
      %1278 = vmatpush1.bf16.msra.mxu0 0
      %1279 = vmatprep.subr.bf16.mxu0 0
      %1280 = vmatpush1.bf16.msra.mxu0 0
      %1281 = vmatprep.subr.bf16.mxu0 0
      %1282 = vmatpush1.bf16.msra.mxu0 0
      %1283 = vmatprep.subr.bf16.mxu0 0
      %1284 = vmatpush1.bf16.msra.mxu0 0
      %1285 = vmatprep.subr.bf16.mxu0 0
      %1286 = vmatpush1.bf16.msra.mxu0 0
      %1287 = vmatprep.subr.bf16.mxu0 0
      %1288 = vmatpush1.bf16.msra.mxu0 %v1232
      %1289 = vmatprep.subr.bf16.mxu0 0
      %1290 = vmatpush1.bf16.msra.mxu0 %v1215
      %1291 = vmatprep.subr.bf16.mxu0 0
      %1292 = vmatpush2.bf16.msra.mxu0 0
      %1293 = vmatprep.subr.bf16.mxu0 0
      %1294 = vmatpush2.bf16.msra.mxu0 0
      %1295 = vmatprep.subr.bf16.mxu0 0
      %1296 = vmatpush2.bf16.msra.mxu0 0
      %1297 = vmatprep.subr.bf16.mxu0 0
      %1298 = vmatpush2.bf16.msra.mxu0 0
      %1299 = vmatprep.subr.bf16.mxu0 0
      %1300 = vmatpush2.bf16.msra.mxu0 0
      %1301 = vmatprep.subr.bf16.mxu0 0
      %1302 = vmatpush2.bf16.msra.mxu0 0
      %1303 = vmatprep.subr.bf16.mxu0 0
      %1304 = vmatpush2.bf16.msra.mxu0 0
      %1305 = vmatprep.subr.bf16.mxu0 0
      %1306 = vmatpush2.bf16.msra.mxu0 0
      %1307 = vmatprep.mubr.bf16.mxu0 0
      %1308 = vmatmul.mubr.bf16.gmra.mxu0 %v1223
      %v1309 = vpop.f32.mrf.mxu0
      %v1310 = vadd.f32 0.0, %v1309
      %v1311 = vpop.f32.mrf.mxu0
      %v1312 = vpop.f32.mrf.mxu0
      %v1313 = vpop.f32.mrf.mxu0
      %1314 = vdwg.mxu0
      %v1315 = vadd.f32 %v1149, %v1269
      %v1316 = vadd.f32 %v1151, %v1271
      %v1317 = vadd.f32 %v1190, %v1310
      %v1318 = vsel %vm719, %v1315, 0.0
      %v1319 = vsel %vm720, %v1316, 0.0
      %v1320 = vsel %vm721, %v1317, 0.0
      %v1321 = vadd.f32 %v1318, %v1319
      %v1322 = vadd.f32 %v1321, %v1320
      %1323 = vadd.xlane.f32.xlu0 %v1322
      %v1324 = vpop.xlane.xlu0 %1323
      %v1325 = vmul.f32 %v1318, %v1318
      %v1326 = vmul.f32 %v1319, %v1319
      %v1327 = vmul.f32 %v1320, %v1320
      %v1328 = vadd.f32 %v1325, %v1326
      %v1329 = vadd.f32 %v1328, %v1327
      %1330 = vadd.xlane.f32.xlu0 %v1329
      %v1331 = vpop.xlane.xlu0 %1330
      %v1332 = vmul.f32 %v1324, 0.00390625
      %v1333 = vmul.f32 %v1331, 0.00390625
      %v1334 = vmul.f32 %v1332, %v1332
      %v1335 = vsub.f32 %v1333, %v1334
      %v1336 = vsub.f32 %v1315, %v1332
      %v1337 = vsub.f32 %v1316, %v1332
      %v1338 = vsub.f32 %v1317, %v1332
      %v1339 = vadd.f32 %v1335, 1e-05
      %v1340 = vrsqrt.pop %v1339
      %v1341 = vmul.f32 %v1336, %v1340
      %v1342 = vmul.f32 %v1337, %v1340
      %v1343 = vmul.f32 %v1338, %v1340
      %v1344 = vld [vmem:[%s239] sm:$0xff]
      %v1345 = vld [vmem:[%s239 + $0x8] sm:$0xff]
      %v1346 = vld [vmem:[%s239 + $0x10] sm:$0xff]
      %v1347 = vadd.f32 %v1341, %v1344
      %v1348 = vadd.f32 %v1342, %v1345
      %v1349 = vadd.f32 %v1343, %v1346
      %1350 = vst [vmem:[%s244] sm:$0xff] %v1347
      %1351 = vst [vmem:[%s244 + $0x8] sm:$0xff] %v1348
      %1352 = vst [vmem:[%s244 + $0x10] sm:$0xff] %v1349
      %p1353 = scmp.lt.s32.totalorder %s16, 1
      %s1354 = scalar_select %p1353, %s16, 1
      %s1355 = smul.addr %s1354, 3
      %s1356 = smul.addr %s1355, 8
      %s1357 = scalar_lea.vmem %s5, %s1356
      // Predicated region
      $region41: #{residual_block.1} parent=39 // pred_check
        %p1358 = pneg %p149
      $region42: #{residual_block.1} parent=39 // pred_check_branch
        %1360 = sbr.rel (%p1358) target = $region44
      $region43: #{residual_block.1} parent=39 // pred_region
        _
      $region44: #{residual_block.1} parent=39 // pred_fallthru
        _
    $region40: #{residual_block.1} parent=5 // pred_fallthru
      _
    %p1361 = scmp.le.s32.totalorder 2, %s11
    // Predicated region
    $region45: #{residual_block.1} parent=5 // pred_check
      %p1362 = pneg %p1361
    $region46: #{residual_block.1} parent=5 // pred_check_branch
      %1364 = sbr.rel (%p1362) target = $region48
    $region47: #{residual_block.1} parent=5 // pred_region
      %s1365 = ssub.s32 %s11, 2
      // Predicated region
      $region49: #{residual_block.1} parent=47 // pred_check
        %p1366 = pneg %p155
      $region50: #{residual_block.1} parent=47 // pred_check_branch
        %1368 = sbr.rel (%p1366) target = $region52
      $region51: #{residual_block.1} parent=47 // pred_region
        %p1369 = scmp.lt.s32.totalorder %s17, 1
        %s1370 = scalar_select %p1369, %s17, 1
        %s1371 = smul.addr %s1370, 3
        %s1372 = smul.addr %s1371, 8
        %s1373 = scalar_lea.vmem %s5, %s1372
      $region52: #{residual_block.1} parent=47 // pred_fallthru
        _
    $region48: #{residual_block.1} parent=5 // pred_fallthru
      _
  $region6: #{residual_block.1} parent=0 // loop_footer
    %s15 = sadd.s32 1, %s11
  $region7: #{residual_block.1} parent=0 // loop_footer_branch
    %10 = sbr.rel target = $region3
  $region8: #{residual_block.1} parent=0 // loop_exit
    _

</llo_original>
